<compile_context>
chip_gen: v7x
topology: tpu7x:2x2x1
jax: 0.10.0
libtpu: 0.0.40
codegen_flags: <defaults>
</compile_context>

<pallas_src>
import jax
import jax.numpy as jnp
from jax import lax
from jax.experimental import pallas as pl
from jax.experimental.pallas import tpu as pltpu


def _make_residual_block_kernel(H, W, C):
    """Kernel closure over static spatial/channel sizes."""
    WC = W * C

    def kernel(x_ref, m1_ref, s1_ref, b1_ref, m2_ref, s2_ref, b2_ref, o_ref):
        # x_ref  : (1, H, W*C)            unpadded input slab (one image)
        # m*_ref : (3*(W+2)*C, W*C)       banded (block-Toeplitz) conv weights
        # s*/b*  : (1, W*C)               folded BN scale/shift tiled across W
        # o_ref  : (1, H, W*C)
        x = x_ref[0].astype(jnp.float32)                      # (H, W*C)

        def pad2d(a):
            # 1-pixel spatial halo built in registers (no VMEM scratch).
            zr = jnp.zeros((1, WC), jnp.float32)
            a = jnp.concatenate([zr, a, zr], axis=0)          # (H+2, W*C)
            zc = jnp.zeros((H + 2, C), jnp.float32)
            return jnp.concatenate([zc, a, zc], axis=1)       # (H+2, (W+2)*C)

        def conv3x3(a, m_ref):
            ap = pad2d(a)
            # Stack the 3 row-shifted slabs along lanes -> single MXU matmul.
            p = jnp.concatenate(
                [ap[0:H, :], ap[1:H + 1, :], ap[2:H + 2, :]],
                axis=1)                                       # (H, 3*(W+2)*C)
            return jnp.dot(p, m_ref[...].astype(jnp.float32),
                           preferred_element_type=jnp.float32,
                           precision=lax.Precision.HIGHEST)   # (H, W*C)

        # conv1 -> BN1 (folded) -> ReLU
        y = conv3x3(x, m1_ref)
        y = jnp.maximum(y * s1_ref[...] + b1_ref[...], 0.0)
        # conv2 -> BN2 (folded) -> + residual
        y = conv3x3(y, m2_ref)
        y = y * s2_ref[...] + b2_ref[...]
        o_ref[0] = (y + x).astype(o_ref.dtype)

    return kernel


def _build_banded_weights(w, W, C):
    """w: (3, 3, Cin, Cout) -> (3*(W+2)*C, W*C) block-Toeplitz matmul weights.

    M[dy*(W+2)*C + (wi+dx)*C + ci, wi*C + co] = w[dy, dx, ci, co]
    so that  out2d = concat_dy(xpad2d[dy:dy+H]) @ M  is the 3x3 conv.
    """
    Wp = W + 2
    bands = []
    for dy in range(3):
        band = jnp.zeros((Wp * C, W * C), w.dtype)
        for dx in range(3):
            sel = jnp.eye(Wp, W, k=-dx, dtype=w.dtype)  # sel[j+dx, j] = 1
            band = band + jnp.kron(sel, w[dy, dx])
        bands.append(band)
    return jnp.concatenate(bands, axis=0)


def basic_residual_block(x_nchw, w1, s1, b1, w2, s2, b2):
    """x_nchw: (N, C, H, W) f32; w*: (3,3,C,C) [ky,kx,cin,cout]; s*/b*: (C,)."""
    N, C, H, W = x_nchw.shape
    WC = W * C
    K = 3 * (W + 2) * C

    # Channels-last with W folded into the lane axis -> lane-dense slabs.
    x2d = jnp.transpose(x_nchw, (0, 2, 3, 1)).reshape(N, H, WC)

    m1 = _build_banded_weights(w1, W, C)
    m2 = _build_banded_weights(w2, W, C)
    s1t = jnp.tile(s1, W).reshape(1, WC)
    b1t = jnp.tile(b1, W).reshape(1, WC)
    s2t = jnp.tile(s2, W).reshape(1, WC)
    b2t = jnp.tile(b2, W).reshape(1, WC)

    out2d = pl.pallas_call(
        _make_residual_block_kernel(H, W, C),
        out_shape=jax.ShapeDtypeStruct((N, H, WC), x_nchw.dtype),
        grid_spec=pltpu.PrefetchScalarGridSpec(
            num_scalar_prefetch=0,
            grid=(N,),
            in_specs=[
                pl.BlockSpec((1, H, WC), lambda n: (n, 0, 0)),
                pl.BlockSpec((K, WC), lambda n: (0, 0)),
                pl.BlockSpec((1, WC), lambda n: (0, 0)),
                pl.BlockSpec((1, WC), lambda n: (0, 0)),
                pl.BlockSpec((K, WC), lambda n: (0, 0)),
                pl.BlockSpec((1, WC), lambda n: (0, 0)),
                pl.BlockSpec((1, WC), lambda n: (0, 0)),
            ],
            out_specs=pl.BlockSpec((1, H, WC), lambda n: (n, 0, 0)),
        ),
        compiler_params=pltpu.CompilerParams(
            dimension_semantics=("parallel",)),
    )(x2d, m1, s1t, b1t, m2, s2t, b2t)

    return jnp.transpose(out2d.reshape(N, H, W, C), (0, 3, 1, 2))


def _fold_bn(conv_bias, gamma, beta, mean, var, eps=1e-5):
    scale = gamma / jnp.sqrt(var + eps)
    shift = (conv_bias - mean) * scale + beta
    return scale, shift


def _reference_forward(x, tw1, tb1, g1, be1, m1, v1,
                       tw2, tb2, g2, be2, m2, v2, eps=1e-5):
    """Pure-JAX reference matching the PyTorch module (eval-mode BN)."""
    def conv(inp, w, b):
        y = lax.conv_general_dilated(
            inp, w, window_strides=(1, 1), padding=((1, 1), (1, 1)),
            dimension_numbers=('NCHW', 'OIHW', 'NCHW'),
            precision=lax.Precision.HIGHEST)
        return y + b[None, :, None, None]

    def bn(inp, g, be, m, v):
        return ((inp - m[None, :, None, None])
                / jnp.sqrt(v[None, :, None, None] + eps)
                * g[None, :, None, None] + be[None, :, None, None])

    y = jax.nn.relu(bn(conv(x, tw1, tb1), g1, be1, m1, v1))
    y = bn(conv(y, tw2, tb2), g2, be2, m2, v2)
    return y + x


if __name__ == "__main__":
    N, C, H, W = 2, 4, 16, 16

    key = jax.random.PRNGKey(0)
    ks = jax.random.split(key, 13)

    x = jax.random.normal(ks[0], (N, C, H, W), jnp.float32)

    # Conv weights in PyTorch layout (Cout, Cin, 3, 3) + biases
    tw1 = jax.random.normal(ks[1], (C, C, 3, 3), jnp.float32) * 0.1
    tb1 = jax.random.normal(ks[2], (C,), jnp.float32) * 0.1
    tw2 = jax.random.normal(ks[3], (C, C, 3, 3), jnp.float32) * 0.1
    tb2 = jax.random.normal(ks[4], (C,), jnp.float32) * 0.1

    # BatchNorm parameters / running stats (inference mode)
    g1 = 1.0 + 0.1 * jax.random.normal(ks[5], (C,), jnp.float32)
    be1 = 0.1 * jax.random.normal(ks[6], (C,), jnp.float32)
    m1 = 0.1 * jax.random.normal(ks[7], (C,), jnp.float32)
    v1 = 1.0 + 0.1 * jnp.abs(jax.random.normal(ks[8], (C,), jnp.float32))
    g2 = 1.0 + 0.1 * jax.random.normal(ks[9], (C,), jnp.float32)
    be2 = 0.1 * jax.random.normal(ks[10], (C,), jnp.float32)
    m2 = 0.1 * jax.random.normal(ks[11], (C,), jnp.float32)
    v2 = 1.0 + 0.1 * jnp.abs(jax.random.normal(ks[12], (C,), jnp.float32))

    # Fold conv bias + BN into per-channel scale/shift; convert weights to
    # kernel layout (ky, kx, cin, cout).
    s1, b1 = _fold_bn(tb1, g1, be1, m1, v1)
    s2, b2 = _fold_bn(tb2, g2, be2, m2, v2)
    w1 = jnp.transpose(tw1, (2, 3, 1, 0))
    w2 = jnp.transpose(tw2, (2, 3, 1, 0))

    out = basic_residual_block(x, w1, s1, b1, w2, s2, b2)
    out = jax.block_until_ready(out)

    ref = _reference_forward(x, tw1, tb1, g1, be1, m1, v1,
                             tw2, tb2, g2, be2, m2, v2)
    ref = jax.block_until_ready(ref)

    assert out.shape == (N, C, H, W)
    assert jnp.allclose(out, ref, atol=1e-4, rtol=1e-4), (
        float(jnp.max(jnp.abs(out - ref))))

    print("KERNEL_OK")
</pallas_src>

<mosaic_0001>
module attributes {stable_mosaic.version = 11 : i64} {
  func.func @kernel(%arg0: i32, %arg1: memref<1x16x64xf32, #tpu.memory_space<vmem>>, %arg2: memref<216x64xf32, #tpu.memory_space<vmem>>, %arg3: memref<1x64xf32, #tpu.memory_space<vmem>>, %arg4: memref<1x64xf32, #tpu.memory_space<vmem>>, %arg5: memref<216x64xf32, #tpu.memory_space<vmem>>, %arg6: memref<1x64xf32, #tpu.memory_space<vmem>>, %arg7: memref<1x64xf32, #tpu.memory_space<vmem>>, %arg8: memref<1x16x64xf32, #tpu.memory_space<vmem>>) attributes {dimension_semantics = [#tpu.dimension_semantics<parallel>], iteration_bounds = array<i64: 2>, scalar_prefetch = 0 : i64, scratch_operands = 0 : i64, tpu.core_type = #tpu.core_type<tc>, window_params = [{transform_indices = @transform_0, window_bounds = array<i64: 1, 16, 64>}, {pipeline_mode = #tpu.pipeline_mode<synchronous>, transform_indices = @transform_1, window_bounds = array<i64: 216, 64>}, {pipeline_mode = #tpu.pipeline_mode<synchronous>, transform_indices = @transform_2, window_bounds = array<i64: 1, 64>}, {pipeline_mode = #tpu.pipeline_mode<synchronous>, transform_indices = @transform_3, window_bounds = array<i64: 1, 64>}, {pipeline_mode = #tpu.pipeline_mode<synchronous>, transform_indices = @transform_4, window_bounds = array<i64: 216, 64>}, {pipeline_mode = #tpu.pipeline_mode<synchronous>, transform_indices = @transform_5, window_bounds = array<i64: 1, 64>}, {pipeline_mode = #tpu.pipeline_mode<synchronous>, transform_indices = @transform_6, window_bounds = array<i64: 1, 64>}, {transform_indices = @transform_7, window_bounds = array<i64: 1, 16, 64>}]} {
    %c0 = arith.constant 0 : index
    %c0_0 = arith.constant 0 : index
    %c0_1 = arith.constant 0 : index
    %0 = vector.load %arg1[%c0, %c0_0, %c0_1] : memref<1x16x64xf32, #tpu.memory_space<vmem>>, vector<1x16x64xf32>
    %1 = vector.shape_cast %0 : vector<1x16x64xf32> to vector<16x64xf32>
    %cst = arith.constant 0.000000e+00 : f32
    %2 = vector.broadcast %cst : f32 to vector<1x64xf32>
    %3 = tpu.concatenate %2, %1, %2 in 0 : vector<1x64xf32>, vector<16x64xf32>, vector<1x64xf32> -> vector<18x64xf32>
    %cst_2 = arith.constant 0.000000e+00 : f32
    %4 = vector.broadcast %cst_2 : f32 to vector<18x4xf32>
    %5 = tpu.concatenate %4, %3, %4 in 1 : vector<18x4xf32>, vector<18x64xf32>, vector<18x4xf32> -> vector<18x72xf32>
    %6 = vector.extract_strided_slice %5 {offsets = [0, 0], sizes = [16, 72], strides = [1, 1]} : vector<18x72xf32> to vector<16x72xf32>
    %7 = vector.extract_strided_slice %5 {offsets = [1, 0], sizes = [16, 72], strides = [1, 1]} : vector<18x72xf32> to vector<16x72xf32>
    %8 = vector.extract_strided_slice %5 {offsets = [2, 0], sizes = [16, 72], strides = [1, 1]} : vector<18x72xf32> to vector<16x72xf32>
    %9 = tpu.concatenate %6, %7, %8 in 1 : vector<16x72xf32>, vector<16x72xf32>, vector<16x72xf32> -> vector<16x216xf32>
    %c0_3 = arith.constant 0 : index
    %c0_4 = arith.constant 0 : index
    %10 = vector.load %arg2[%c0_3, %c0_4] : memref<216x64xf32, #tpu.memory_space<vmem>>, vector<216x64xf32>
    %cst_5 = arith.constant dense<0.000000e+00> : vector<16x64xf32>
    %11 = tpu.matmul %9, %10, %cst_5 {dimension_numbers = #tpu.dot_dimension_numbers<[1], [0], [0], [1], [0, 0, 1, 1], [], []>, precision = #tpu.contract_precision<fp32>} : vector<16x216xf32>, vector<216x64xf32>, vector<16x64xf32> -> vector<16x64xf32>
    %c0_6 = arith.constant 0 : index
    %c0_7 = arith.constant 0 : index
    %12 = vector.load %arg3[%c0_6, %c0_7] : memref<1x64xf32, #tpu.memory_space<vmem>>, vector<1x64xf32>
    %13 = vector.broadcast %12 : vector<1x64xf32> to vector<16x64xf32>
    %14 = arith.mulf %11, %13 : vector<16x64xf32>
    %c0_8 = arith.constant 0 : index
    %c0_9 = arith.constant 0 : index
    %15 = vector.load %arg4[%c0_8, %c0_9] : memref<1x64xf32, #tpu.memory_space<vmem>>, vector<1x64xf32>
    %16 = vector.broadcast %15 : vector<1x64xf32> to vector<16x64xf32>
    %17 = arith.addf %14, %16 : vector<16x64xf32>
    %cst_10 = arith.constant 0.000000e+00 : f32
    %18 = vector.broadcast %cst_10 : f32 to vector<16x64xf32>
    %19 = arith.maximumf %17, %18 : vector<16x64xf32>
    %cst_11 = arith.constant 0.000000e+00 : f32
    %20 = vector.broadcast %cst_11 : f32 to vector<1x64xf32>
    %21 = tpu.concatenate %20, %19, %20 in 0 : vector<1x64xf32>, vector<16x64xf32>, vector<1x64xf32> -> vector<18x64xf32>
    %cst_12 = arith.constant 0.000000e+00 : f32
    %22 = vector.broadcast %cst_12 : f32 to vector<18x4xf32>
    %23 = tpu.concatenate %22, %21, %22 in 1 : vector<18x4xf32>, vector<18x64xf32>, vector<18x4xf32> -> vector<18x72xf32>
    %24 = vector.extract_strided_slice %23 {offsets = [0, 0], sizes = [16, 72], strides = [1, 1]} : vector<18x72xf32> to vector<16x72xf32>
    %25 = vector.extract_strided_slice %23 {offsets = [1, 0], sizes = [16, 72], strides = [1, 1]} : vector<18x72xf32> to vector<16x72xf32>
    %26 = vector.extract_strided_slice %23 {offsets = [2, 0], sizes = [16, 72], strides = [1, 1]} : vector<18x72xf32> to vector<16x72xf32>
    %27 = tpu.concatenate %24, %25, %26 in 1 : vector<16x72xf32>, vector<16x72xf32>, vector<16x72xf32> -> vector<16x216xf32>
    %c0_13 = arith.constant 0 : index
    %c0_14 = arith.constant 0 : index
    %28 = vector.load %arg5[%c0_13, %c0_14] : memref<216x64xf32, #tpu.memory_space<vmem>>, vector<216x64xf32>
    %cst_15 = arith.constant dense<0.000000e+00> : vector<16x64xf32>
    %29 = tpu.matmul %27, %28, %cst_15 {dimension_numbers = #tpu.dot_dimension_numbers<[1], [0], [0], [1], [0, 0, 1, 1], [], []>, precision = #tpu.contract_precision<fp32>} : vector<16x216xf32>, vector<216x64xf32>, vector<16x64xf32> -> vector<16x64xf32>
    %c0_16 = arith.constant 0 : index
    %c0_17 = arith.constant 0 : index
    %30 = vector.load %arg6[%c0_16, %c0_17] : memref<1x64xf32, #tpu.memory_space<vmem>>, vector<1x64xf32>
    %31 = vector.broadcast %30 : vector<1x64xf32> to vector<16x64xf32>
    %32 = arith.mulf %29, %31 : vector<16x64xf32>
    %c0_18 = arith.constant 0 : index
    %c0_19 = arith.constant 0 : index
    %33 = vector.load %arg7[%c0_18, %c0_19] : memref<1x64xf32, #tpu.memory_space<vmem>>, vector<1x64xf32>
    %34 = vector.broadcast %33 : vector<1x64xf32> to vector<16x64xf32>
    %35 = arith.addf %32, %34 : vector<16x64xf32>
    %36 = arith.addf %35, %1 : vector<16x64xf32>
    %c0_20 = arith.constant 0 : index
    %c0_21 = arith.constant 0 : index
    %c0_22 = arith.constant 0 : index
    %37 = vector.load %arg8[%c0_20, %c0_21, %c0_22] : memref<1x16x64xf32, #tpu.memory_space<vmem>>, vector<1x16x64xf32>
    %38 = vector.shape_cast %37 : vector<1x16x64xf32> to vector<16x64xf32>
    %39 = vector.shape_cast %36 : vector<16x64xf32> to vector<1x16x64xf32>
    tpu.vector_store %arg8[%c0_20, %c0_21, %c0_22], %39 {strides = array<i32>} : memref<1x16x64xf32, #tpu.memory_space<vmem>>, vector<1x16x64xf32>,
    return
  }
  func.func @transform_0(%arg0: i32) -> (i32, i32, i32) {
    %c0_i32 = arith.constant 0 : i32
    %c0_i32_0 = arith.constant 0 : i32
    %c0_i32_1 = arith.constant 0 : i32
    return %arg0, %c0_i32, %c0_i32_0 : i32, i32, i32
  }
  func.func @transform_1(%arg0: i32) -> (i32, i32) {
    %c0_i32 = arith.constant 0 : i32
    %c0_i32_0 = arith.constant 0 : i32
    %c0_i32_1 = arith.constant 0 : i32
    return %c0_i32, %c0_i32_0 : i32, i32
  }
  func.func @transform_2(%arg0: i32) -> (i32, i32) {
    %c0_i32 = arith.constant 0 : i32
    %c0_i32_0 = arith.constant 0 : i32
    %c0_i32_1 = arith.constant 0 : i32
    return %c0_i32, %c0_i32_0 : i32, i32
  }
  func.func @transform_3(%arg0: i32) -> (i32, i32) {
    %c0_i32 = arith.constant 0 : i32
    %c0_i32_0 = arith.constant 0 : i32
    %c0_i32_1 = arith.constant 0 : i32
    return %c0_i32, %c0_i32_0 : i32, i32
  }
  func.func @transform_4(%arg0: i32) -> (i32, i32) {
    %c0_i32 = arith.constant 0 : i32
    %c0_i32_0 = arith.constant 0 : i32
    %c0_i32_1 = arith.constant 0 : i32
    return %c0_i32, %c0_i32_0 : i32, i32
  }
  func.func @transform_5(%arg0: i32) -> (i32, i32) {
    %c0_i32 = arith.constant 0 : i32
    %c0_i32_0 = arith.constant 0 : i32
    %c0_i32_1 = arith.constant 0 : i32
    return %c0_i32, %c0_i32_0 : i32, i32
  }
  func.func @transform_6(%arg0: i32) -> (i32, i32) {
    %c0_i32 = arith.constant 0 : i32
    %c0_i32_0 = arith.constant 0 : i32
    %c0_i32_1 = arith.constant 0 : i32
    return %c0_i32, %c0_i32_0 : i32, i32
  }
  func.func @transform_7(%arg0: i32) -> (i32, i32, i32) {
    %c0_i32 = arith.constant 0 : i32
    %c0_i32_0 = arith.constant 0 : i32
    %c0_i32_1 = arith.constant 0 : i32
    return %arg0, %c0_i32, %c0_i32_0 : i32, i32, i32
  }
}

</mosaic_0001>

<llo_original>
// kernel: tpu_custom_call.1
$region0: #{tpu_custom_call.1}
  #allocation0 [shape = 'u32[]', space=smem, size = 0x4, offset = 0x4, fixed_abs, tag = 'smem constant byte address 0x4 - core index']
  #allocation1 [shape = 'u32[144,128]{1,0:T(1,128)}', space=vmem, size = 0x12000, scoped, tag = 'internal scratch']
  %s0 = inlined_call_operand.vmem [shape: f32[2,16,64], index: 0, kind: input, shape index: {}]
  %s1 = inlined_call_operand.vmem [shape: f32[216,64], index: 1, kind: input, shape index: {}]
  %s2 = inlined_call_operand.vmem [shape: f32[1,64], index: 2, kind: input, shape index: {}]
  %s3 = inlined_call_operand.vmem [shape: f32[1,64], index: 3, kind: input, shape index: {}]
  %s4 = inlined_call_operand.vmem [shape: f32[216,64], index: 4, kind: input, shape index: {}]
  %s5 = inlined_call_operand.vmem [shape: f32[1,64], index: 5, kind: input, shape index: {}]
  %s6 = inlined_call_operand.vmem [shape: f32[1,64], index: 6, kind: input, shape index: {}]
  %s7 = inlined_call_operand.hbm [shape: f32[2,16,64], index: 7, kind: output, shape index: {}]
  %s8 = sld [smem:[#allocation0]]
  $region61: #{tpu_custom_call.1} parent=0
    _
  %s10 = ssub.s32 1, %s8
  %s11 = scalar_select 0, %s10, %s8
  $region1: #{tpu_custom_call.1} parent=0
    #allocation2 [shape = 'u8[16384]{0}', space=vmem, size = 0x4000, scoped, tag = 'output window, operand 0']
    #allocation3 [shape = 's32[2]{0}', space=sflag, size = 0x8, scoped, tag = 'scoped memory for tpu_custom_call.1']
    %12 = vsyncpa [#allocation3], 0
    %s13 = scalar_lea.sflag [#allocation3], 1
    %14 = vsyncpa %s13, 0
    loop: start=0, step=1, limit=4
    $region2: #{tpu_custom_call.1} parent=1 // loop_pre_header
      _
    $region3: #{tpu_custom_call.1} parent=1 // loop_header
      %s16 = sphi 0, %s20
      %p17 = scmp.ge.s32.totalorder %s16, 4
      %s26 = sphi 0, %s28
      %s29 = sphi 0, %s26
      %s30 = sphi 0, %s29
      %s46 = sphi 0, %s30
      %s50 = sphi 0, %s50
      %s52 = sphi 0, %s50
      %s53 = sphi 0, %s52
      %s67 = sphi 0, %s53
      %s71 = sphi 0, %s71
      %s73 = sphi 0, %s71
      %s74 = sphi 0, %s73
      %s88 = sphi 0, %s74
      %s92 = sphi 0, %s92
      %s94 = sphi 0, %s92
      %s95 = sphi 0, %s94
      %s109 = sphi 0, %s95
      %s113 = sphi 0, %s113
      %s115 = sphi 0, %s113
      %s116 = sphi 0, %s115
      %s130 = sphi 0, %s116
      %s134 = sphi 0, %s134
      %s136 = sphi 0, %s134
      %s137 = sphi 0, %s136
      %s151 = sphi 0, %s137
      %s155 = sphi 0, %s155
      %s157 = sphi 0, %s155
      %s158 = sphi 0, %s157
      %s172 = sphi 0, %s158
      %s178 = sphi 0, %s180
      %s181 = sphi 0, %s178
      %s182 = sphi 0, %s181
      %s198 = sphi 0, %s182
    $region4: #{tpu_custom_call.1} parent=1 // loop_header_branch
      %19 = sbr.rel (%p17) target = $region8
    $region5: #{tpu_custom_call.1} parent=1 // loop_body
      %s21 = ssub.s32 %s16, 1
      %s22 = ssub.s32 %s16, 2
      %s23 = sadd.s32 %s16, 1
      %s24 = ssub.s32 %s16, %s23
      %p25 = scmp.eq.s32.totalorder %s24, 0
      %s27 = sadd.s32 %s26, 1
      %s28 = scalar_select %p25, %s26, %s27
      %p31 = pneg %p25
      %p32 = scmp.eq.s32.totalorder %s16, 1
      %p33 = por %p31, %p32
      %p34 = scmp.ne.s32.totalorder %s26, %s29
      %p35 = scmp.eq.s32.totalorder %s16, 0
      %p36 = por %p34, %p35
      %p37 = scmp.ne.s32.totalorder %s26, %s29
      %p38 = scmp.eq.s32.totalorder %s21, 1
      %p39 = por %p37, %p38
      %p40 = scmp.ne.s32.totalorder %s29, %s30
      %p41 = scmp.eq.s32.totalorder %s21, 0
      %p42 = por %p40, %p41
      %p43 = scmp.ne.s32.totalorder %s29, %s30
      %p44 = scmp.eq.s32.totalorder %s22, 1
      %p45 = por %p43, %p44
      %p47 = scmp.ne.s32.totalorder %s30, %s46
      %p48 = scmp.eq.s32.totalorder %s22, 0
      %p49 = por %p47, %p48
      %s51 = sadd.s32 %s50, 1
      %p54 = scmp.eq.s32.totalorder %s16, 1
      %p55 = scmp.ne.s32.totalorder %s50, %s52
      %p56 = scmp.eq.s32.totalorder %s16, 0
      %p57 = por %p55, %p56
      %p58 = scmp.ne.s32.totalorder %s50, %s52
      %p59 = scmp.eq.s32.totalorder %s21, 1
      %p60 = por %p58, %p59
      %p61 = scmp.ne.s32.totalorder %s52, %s53
      %p62 = scmp.eq.s32.totalorder %s21, 0
      %p63 = por %p61, %p62
      %p64 = scmp.ne.s32.totalorder %s52, %s53
      %p65 = scmp.eq.s32.totalorder %s22, 1
      %p66 = por %p64, %p65
      %p68 = scmp.ne.s32.totalorder %s53, %s67
      %p69 = scmp.eq.s32.totalorder %s22, 0
      %p70 = por %p68, %p69
      %s72 = sadd.s32 %s71, 1
      %p75 = scmp.eq.s32.totalorder %s16, 1
      %p76 = scmp.ne.s32.totalorder %s71, %s73
      %p77 = scmp.eq.s32.totalorder %s16, 0
      %p78 = por %p76, %p77
      %p79 = scmp.ne.s32.totalorder %s71, %s73
      %p80 = scmp.eq.s32.totalorder %s21, 1
      %p81 = por %p79, %p80
      %p82 = scmp.ne.s32.totalorder %s73, %s74
      %p83 = scmp.eq.s32.totalorder %s21, 0
      %p84 = por %p82, %p83
      %p85 = scmp.ne.s32.totalorder %s73, %s74
      %p86 = scmp.eq.s32.totalorder %s22, 1
      %p87 = por %p85, %p86
      %p89 = scmp.ne.s32.totalorder %s74, %s88
      %p90 = scmp.eq.s32.totalorder %s22, 0
      %p91 = por %p89, %p90
      %s93 = sadd.s32 %s92, 1
      %p96 = scmp.eq.s32.totalorder %s16, 1
      %p97 = scmp.ne.s32.totalorder %s92, %s94
      %p98 = scmp.eq.s32.totalorder %s16, 0
      %p99 = por %p97, %p98
      %p100 = scmp.ne.s32.totalorder %s92, %s94
      %p101 = scmp.eq.s32.totalorder %s21, 1
      %p102 = por %p100, %p101
      %p103 = scmp.ne.s32.totalorder %s94, %s95
      %p104 = scmp.eq.s32.totalorder %s21, 0
      %p105 = por %p103, %p104
      %p106 = scmp.ne.s32.totalorder %s94, %s95
      %p107 = scmp.eq.s32.totalorder %s22, 1
      %p108 = por %p106, %p107
      %p110 = scmp.ne.s32.totalorder %s95, %s109
      %p111 = scmp.eq.s32.totalorder %s22, 0
      %p112 = por %p110, %p111
      %s114 = sadd.s32 %s113, 1
      %p117 = scmp.eq.s32.totalorder %s16, 1
      %p118 = scmp.ne.s32.totalorder %s113, %s115
      %p119 = scmp.eq.s32.totalorder %s16, 0
      %p120 = por %p118, %p119
      %p121 = scmp.ne.s32.totalorder %s113, %s115
      %p122 = scmp.eq.s32.totalorder %s21, 1
      %p123 = por %p121, %p122
      %p124 = scmp.ne.s32.totalorder %s115, %s116
      %p125 = scmp.eq.s32.totalorder %s21, 0
      %p126 = por %p124, %p125
      %p127 = scmp.ne.s32.totalorder %s115, %s116
      %p128 = scmp.eq.s32.totalorder %s22, 1
      %p129 = por %p127, %p128
      %p131 = scmp.ne.s32.totalorder %s116, %s130
      %p132 = scmp.eq.s32.totalorder %s22, 0
      %p133 = por %p131, %p132
      %s135 = sadd.s32 %s134, 1
      %p138 = scmp.eq.s32.totalorder %s16, 1
      %p139 = scmp.ne.s32.totalorder %s134, %s136
      %p140 = scmp.eq.s32.totalorder %s16, 0
      %p141 = por %p139, %p140
      %p142 = scmp.ne.s32.totalorder %s134, %s136
      %p143 = scmp.eq.s32.totalorder %s21, 1
      %p144 = por %p142, %p143
      %p145 = scmp.ne.s32.totalorder %s136, %s137
      %p146 = scmp.eq.s32.totalorder %s21, 0
      %p147 = por %p145, %p146
      %p148 = scmp.ne.s32.totalorder %s136, %s137
      %p149 = scmp.eq.s32.totalorder %s22, 1
      %p150 = por %p148, %p149
      %p152 = scmp.ne.s32.totalorder %s137, %s151
      %p153 = scmp.eq.s32.totalorder %s22, 0
      %p154 = por %p152, %p153
      %s156 = sadd.s32 %s155, 1
      %p159 = scmp.eq.s32.totalorder %s16, 1
      %p160 = scmp.ne.s32.totalorder %s155, %s157
      %p161 = scmp.eq.s32.totalorder %s16, 0
      %p162 = por %p160, %p161
      %p163 = scmp.ne.s32.totalorder %s155, %s157
      %p164 = scmp.eq.s32.totalorder %s21, 1
      %p165 = por %p163, %p164
      %p166 = scmp.ne.s32.totalorder %s157, %s158
      %p167 = scmp.eq.s32.totalorder %s21, 0
      %p168 = por %p166, %p167
      %p169 = scmp.ne.s32.totalorder %s157, %s158
      %p170 = scmp.eq.s32.totalorder %s22, 1
      %p171 = por %p169, %p170
      %p173 = scmp.ne.s32.totalorder %s158, %s172
      %p174 = scmp.eq.s32.totalorder %s22, 0
      %p175 = por %p173, %p174
      %s176 = ssub.s32 %s16, %s23
      %p177 = scmp.eq.s32.totalorder %s176, 0
      %s179 = sadd.s32 %s178, 1
      %s180 = scalar_select %p177, %s178, %s179
      %p183 = pneg %p177
      %p184 = scmp.eq.s32.totalorder %s16, 1
      %p185 = por %p183, %p184
      %p186 = scmp.ne.s32.totalorder %s178, %s181
      %p187 = scmp.eq.s32.totalorder %s16, 0
      %p188 = por %p186, %p187
      %p189 = scmp.ne.s32.totalorder %s178, %s181
      %p190 = scmp.eq.s32.totalorder %s21, 1
      %p191 = por %p189, %p190
      %p192 = scmp.ne.s32.totalorder %s181, %s182
      %p193 = scmp.eq.s32.totalorder %s21, 0
      %p194 = por %p192, %p193
      %p195 = scmp.ne.s32.totalorder %s181, %s182
      %p196 = scmp.eq.s32.totalorder %s22, 1
      %p197 = por %p195, %p196
      %p199 = scmp.ne.s32.totalorder %s182, %s198
      %p200 = scmp.eq.s32.totalorder %s22, 0
      %p201 = por %p199, %p200
      %p202 = scmp.le.s32.totalorder 1, %s16
      %p203 = scmp.lt.s32.totalorder %s16, 3
      %p204 = pnand %p202, %p203
      %p205 = pneg %p204
      // Predicated region
      $region9: #{tpu_custom_call.1} parent=5 // pred_check
        _
      $region10: #{tpu_custom_call.1} parent=5 // pred_check_branch
        %207 = sbr.rel (%p204) target = $region12
      $region11: #{tpu_custom_call.1} parent=5 // pred_region
        %s208 = ssub.s32 %s16, 1
        // Predicated region
        $region13: #{tpu_custom_call.1} parent=11 // pred_check
          %p209 = pneg %p63
        $region14: #{tpu_custom_call.1} parent=11 // pred_check_branch
          %211 = sbr.rel (%p209) target = $region16
        $region15: #{tpu_custom_call.1} parent=11 // pred_region
          _
        $region16: #{tpu_custom_call.1} parent=11 // pred_fallthru
          _
        // Predicated region
        $region17: #{tpu_custom_call.1} parent=11 // pred_check
          %p212 = pneg %p84
        $region18: #{tpu_custom_call.1} parent=11 // pred_check_branch
          %214 = sbr.rel (%p212) target = $region20
        $region19: #{tpu_custom_call.1} parent=11 // pred_region
          _
        $region20: #{tpu_custom_call.1} parent=11 // pred_fallthru
          _
        // Predicated region
        $region21: #{tpu_custom_call.1} parent=11 // pred_check
          %p215 = pneg %p105
        $region22: #{tpu_custom_call.1} parent=11 // pred_check_branch
          %217 = sbr.rel (%p215) target = $region24
        $region23: #{tpu_custom_call.1} parent=11 // pred_region
          _
        $region24: #{tpu_custom_call.1} parent=11 // pred_fallthru
          _
        // Predicated region
        $region25: #{tpu_custom_call.1} parent=11 // pred_check
          %p218 = pneg %p126
        $region26: #{tpu_custom_call.1} parent=11 // pred_check_branch
          %220 = sbr.rel (%p218) target = $region28
        $region27: #{tpu_custom_call.1} parent=11 // pred_region
          _
        $region28: #{tpu_custom_call.1} parent=11 // pred_fallthru
          _
        // Predicated region
        $region29: #{tpu_custom_call.1} parent=11 // pred_check
          %p221 = pneg %p147
        $region30: #{tpu_custom_call.1} parent=11 // pred_check_branch
          %223 = sbr.rel (%p221) target = $region32
        $region31: #{tpu_custom_call.1} parent=11 // pred_region
          _
        $region32: #{tpu_custom_call.1} parent=11 // pred_fallthru
          _
        // Predicated region
        $region33: #{tpu_custom_call.1} parent=11 // pred_check
          %p224 = pneg %p168
        $region34: #{tpu_custom_call.1} parent=11 // pred_check_branch
          %226 = sbr.rel (%p224) target = $region36
        $region35: #{tpu_custom_call.1} parent=11 // pred_region
          _
        $region36: #{tpu_custom_call.1} parent=11 // pred_fallthru
          _
      $region12: #{tpu_custom_call.1} parent=5 // pred_fallthru
        _
      %p227 = scmp.lt.s32.totalorder %s16, 2
      // Predicated region
      $region37: #{tpu_custom_call.1} parent=5 // pred_check
        %p228 = pneg %p227
      $region38: #{tpu_custom_call.1} parent=5 // pred_check_branch
        %230 = sbr.rel (%p228) target = $region40
      $region39: #{tpu_custom_call.1} parent=5 // pred_region
        // Predicated region
        $region41: #{tpu_custom_call.1} parent=39 // pred_check
          %p231 = pneg %p36
        $region42: #{tpu_custom_call.1} parent=39 // pred_check_branch
          %233 = sbr.rel (%p231) target = $region44
        $region43: #{tpu_custom_call.1} parent=39 // pred_region
          %p234 = scmp.lt.s32.totalorder %s16, 1
          %s235 = scalar_select %p234, %s16, 1
          %s236 = smul.addr %s235, 2
          %s237 = smul.addr %s236, 8
          %s238 = scalar_lea.vmem %s0, %s237
        $region44: #{tpu_custom_call.1} parent=39 // pred_fallthru
          _
      $region40: #{tpu_custom_call.1} parent=5 // pred_fallthru
        _
      %p239 = scmp.le.s32.totalorder 1, %s16
      %p240 = scmp.lt.s32.totalorder %s16, 3
      %p241 = pnand %p239, %p240
      %p242 = pneg %p241
      // Predicated region
      $region45: #{tpu_custom_call.1} parent=5 // pred_check
        _
      $region46: #{tpu_custom_call.1} parent=5 // pred_check_branch
        %244 = sbr.rel (%p241) target = $region48
      $region47: #{tpu_custom_call.1} parent=5 // pred_region
        %s245 = ssub.s32 %s16, 1
        %p246 = scmp.lt.s32.totalorder %s21, 1
        %s247 = scalar_select %p246, %s21, 1
        %s248 = smul.addr %s247, 2
        %s249 = smul.addr %s248, 8
        %s250 = scalar_lea.vmem %s0, %s249
        %p251 = pneg %p42
        %p252 = pneg %p39
        %p253 = pneg %p63
        %p254 = pneg %p60
        %p255 = pneg %p84
        %p256 = pneg %p81
        %p257 = pneg %p105
        %p258 = pneg %p102
        %p259 = pneg %p126
        %p260 = pneg %p123
        %p261 = pneg %p147
        %p262 = pneg %p144
        %p263 = pneg %p168
        %p264 = pneg %p165
        %p265 = pneg %p194
        %p266 = pneg %p191
        %s267 = sand.u32 %s181, 1
        %s268 = scalar_lea.sflag [#allocation3], %s267
        %s269 = sand.u32 %s181, 1
        %s270 = smul.addr %s269, 16
        %s271 = scalar_lea.vmem [#allocation2], %s270
        %p272 = scmp.lt.s32.totalorder %s21, 1
        %s273 = scalar_select %p272, %s21, 1
        %s274 = smul.addr %s273, 2
        %s275 = smul.addr %s274, 8
        %s276 = scalar_lea.vmem %s0, %s275
        %v277 = vld [vmem:[%s276] sm:$0xff]
        %v278 = vld [vmem:[%s276 + $0x8] sm:$0xff]
        %vm281 = vcmask 1040384
        %v282 = vrot.slane %v277, 7
        %v283 = vrot.slane %v278, 7
        %v284 = vsel %vm281, %v282, %v283
        %v287 = vsel %vm281, 0.0, %v282
        %v288 = vsel %vm281, %v283, 0.0
        %291 = vrot.lane.b32.xlu0 %v287, 4
        %v292 = vpop.permute.xlu0 %291
        %293 = vrot.lane.b32.xlu0 %v284, 4
        %v294 = vpop.permute.xlu0 %293
        %295 = vrot.lane.b32.xlu0 %v288, 4
        %v296 = vpop.permute.xlu0 %295
        %vm300 = vcmask 31744
        %v301 = vsel %vm300, 0.0, %v292
        %v302 = vsel %vm300, 0.0, %v294
        %v303 = vsel %vm300, 0.0, %v296
        %vm304 = vcmask 556032
        %v305 = vsel %vm304, %v301, 0.0
        %v306 = vsel %vm304, %v302, 0.0
        %v307 = vsel %vm304, %v303, 0.0
        %vm311 = vcmask 1046528
        %v312 = vrot.slane %v305, 1
        %v313 = vrot.slane %v306, 1
        %v314 = vsel %vm311, %v312, %v313
        %v315 = vrot.slane %v307, 1
        %v316 = vsel %vm311, %v313, %v315
        %317 = vrot.lane.b32.xlu0 %v314, 72
        %v318 = vpop.permute.xlu0 %317
        %319 = vrot.lane.b32.xlu0 %v316, 72
        %v320 = vpop.permute.xlu0 %319
        %vm323 = vcmask 1045504
        %v324 = vrot.slane %v305, 2
        %v325 = vrot.slane %v306, 2
        %v326 = vsel %vm323, %v324, %v325
        %v327 = vrot.slane %v307, 2
        %v328 = vsel %vm323, %v325, %v327
        %329 = vrot.lane.b32.xlu0 %v326, 16
        %v330 = vpop.permute.xlu0 %329
        %331 = vrot.lane.b32.xlu0 %v328, 16
        %v332 = vpop.permute.xlu0 %331
        %vm335 = vcmask 588800
        %v336 = vsel %vm335, %v305, %v318
        %v337 = vsel %vm335, %v306, %v320
        %vm338 = vcmask 130048
        %v339 = vsel %vm338, %v318, %v330
        %v340 = vsel %vm338, %v320, %v332
        %v341 = vld [vmem:[%s1] sm:$0xff]
        %v342 = vld [vmem:[%s1 + $0x8] sm:$0xff]
        %v343 = vld [vmem:[%s1 + $0x10] sm:$0xff]
        %v344 = vld [vmem:[%s1 + $0x18] sm:$0xff]
        %v345 = vld [vmem:[%s1 + $0x20] sm:$0xff]
        %v346 = vld [vmem:[%s1 + $0x28] sm:$0xff]
        %v347 = vld [vmem:[%s1 + $0x30] sm:$0xff]
        %v348 = vld [vmem:[%s1 + $0x38] sm:$0xff]
        %v349 = vld [vmem:[%s1 + $0x40] sm:$0xff]
        %v350 = vld [vmem:[%s1 + $0x48] sm:$0xff]
        %v351 = vld [vmem:[%s1 + $0x50] sm:$0xff]
        %v352 = vld [vmem:[%s1 + $0x58] sm:$0xff]
        %v353 = vld [vmem:[%s1 + $0x60] sm:$0xff]
        %v354 = vld [vmem:[%s1 + $0x68] sm:$0xff]
        %v355 = vld [vmem:[%s1 + $0x70] sm:$0xff]
        %v356 = vld [vmem:[%s1 + $0x78] sm:$0xff]
        %v357 = vld [vmem:[%s1 + $0x80] sm:$0xff]
        %v358 = vld [vmem:[%s1 + $0x88] sm:$0xff]
        %v359 = vld [vmem:[%s1 + $0x90] sm:$0xff]
        %v360 = vld [vmem:[%s1 + $0x98] sm:$0xff]
        %v361 = vld [vmem:[%s1 + $0xa0] sm:$0xff]
        %v362 = vld [vmem:[%s1 + $0xa8] sm:$0xff]
        %v363 = vld [vmem:[%s1 + $0xb0] sm:$0xff]
        %v364 = vld [vmem:[%s1 + $0xb8] sm:$0xff]
        %v365 = vld [vmem:[%s1 + $0xc0] sm:$0xff]
        %v366 = vld [vmem:[%s1 + $0xc8] sm:$0xff]
        %v367 = vld [vmem:[%s1 + $0xd0] sm:$0xff]
        %vm368 = vcmask 719872
        %v370 = vsel %vm368, %v339, 0
        %v373 = vsel %vm368, %v340, 0
        %375 = vmatprep.subr.mxu0 0.0
        %v376 = vand.u32 %v341, 4294901760
        %377 = vmatpush1.msra.mxu0 %v376
        %378 = vmatprep.subr.mxu0 0.0
        %v379 = vand.u32 %v342, 4294901760
        %380 = vmatpush1.msra.mxu0 %v379
        %381 = vmatprep.subr.mxu0 0.0
        %v382 = vand.u32 %v343, 4294901760
        %383 = vmatpush1.msra.mxu0 %v382
        %384 = vmatprep.subr.mxu0 0.0
        %v385 = vand.u32 %v344, 4294901760
        %386 = vmatpush1.msra.mxu0 %v385
        %387 = vmatprep.subr.mxu0 0.0
        %v388 = vand.u32 %v345, 4294901760
        %389 = vmatpush1.msra.mxu0 %v388
        %390 = vmatprep.subr.mxu0 0.0
        %v391 = vand.u32 %v346, 4294901760
        %392 = vmatpush1.msra.mxu0 %v391
        %393 = vmatprep.subr.mxu0 0.0
        %v394 = vand.u32 %v347, 4294901760
        %395 = vmatpush1.msra.mxu0 %v394
        %396 = vmatprep.subr.mxu0 0.0
        %v397 = vand.u32 %v348, 4294901760
        %398 = vmatpush1.msra.mxu0 %v397
        %399 = vmatprep.subr.mxu0 0.0
        %v400 = vand.u32 %v349, 4294901760
        %401 = vmatpush1.msra.mxu0 %v400
        %402 = vmatprep.subr.mxu0 0.0
        %v403 = vand.u32 %v350, 4294901760
        %404 = vmatpush1.msra.mxu0 %v403
        %405 = vmatprep.subr.mxu0 0.0
        %v406 = vand.u32 %v351, 4294901760
        %407 = vmatpush1.msra.mxu0 %v406
        %408 = vmatprep.subr.mxu0 0.0
        %v409 = vand.u32 %v352, 4294901760
        %410 = vmatpush1.msra.mxu0 %v409
        %411 = vmatprep.subr.mxu0 0.0
        %v412 = vand.u32 %v353, 4294901760
        %413 = vmatpush1.msra.mxu0 %v412
        %414 = vmatprep.subr.mxu0 0.0
        %v415 = vand.u32 %v354, 4294901760
        %416 = vmatpush1.msra.mxu0 %v415
        %417 = vmatprep.subr.mxu0 0.0
        %v418 = vand.u32 %v355, 4294901760
        %419 = vmatpush1.msra.mxu0 %v418
        %420 = vmatprep.subr.mxu0 0.0
        %v421 = vand.u32 %v356, 4294901760
        %422 = vmatpush1.msra.mxu0 %v421
        %423 = vmatprep.subr.mxu0 0.0
        %v424 = vand.u32 %v357, 4294901760
        %425 = vmatpush1.msra.mxu0 %v424
        %426 = vmatprep.subr.mxu0 0.0
        %v427 = vand.u32 %v358, 4294901760
        %428 = vmatpush1.msra.mxu0 %v427
        %429 = vmatprep.subr.mxu0 0.0
        %v430 = vand.u32 %v359, 4294901760
        %431 = vmatpush1.msra.mxu0 %v430
        %432 = vmatprep.subr.mxu0 0.0
        %v433 = vand.u32 %v360, 4294901760
        %434 = vmatpush1.msra.mxu0 %v433
        %435 = vmatprep.subr.mxu0 0.0
        %v436 = vand.u32 %v361, 4294901760
        %437 = vmatpush1.msra.mxu0 %v436
        %438 = vmatprep.subr.mxu0 0.0
        %v439 = vand.u32 %v362, 4294901760
        %440 = vmatpush1.msra.mxu0 %v439
        %441 = vmatprep.subr.mxu0 0.0
        %v442 = vand.u32 %v363, 4294901760
        %443 = vmatpush1.msra.mxu0 %v442
        %444 = vmatprep.subr.mxu0 0.0
        %v445 = vand.u32 %v364, 4294901760
        %446 = vmatpush1.msra.mxu0 %v445
        %447 = vmatprep.subr.mxu0 0.0
        %v448 = vand.u32 %v365, 4294901760
        %449 = vmatpush1.msra.mxu0 %v448
        %450 = vmatprep.subr.mxu0 0.0
        %v451 = vand.u32 %v366, 4294901760
        %452 = vmatpush1.msra.mxu0 %v451
        %453 = vmatprep.subr.mxu0 0.0
        %v454 = vand.u32 %v367, 4294901760
        %455 = vmatpush1.msra.mxu0 %v454
        %456 = vmatprep.subr.mxu0 0.0
        %457 = vmatpush1.msra.mxu0 0.0
        %458 = vmatprep.subr.mxu0 0.0
        %459 = vmatpush1.msra.mxu0 0.0
        %460 = vmatprep.subr.mxu0 0.0
        %461 = vmatpush1.msra.mxu0 0.0
        %462 = vmatprep.subr.mxu0 0.0
        %463 = vmatpush1.msra.mxu0 0.0
        %464 = vmatprep.subr.mxu0 0.0
        %465 = vmatpush1.msra.mxu0 0.0
        %v466 = vand.u32 %v370, 4294901760
        %v467 = vsub.f32 %v370, %v466
        %v468 = vand.u32 %v467, 4294901760
        %v469 = vsub.f32 %v467, %v468
        %v470 = vand.u32 %v469, 4294901760
        %471 = vmatprep.mubr.f32.mxu0 %v470
        %v472 = vand.u32 %v336, 4294901760
        %v473 = vsub.f32 %v336, %v472
        %v474 = vand.u32 %v473, 4294901760
        %v475 = vsub.f32 %v473, %v474
        %v476 = vand.u32 %v475, 4294901760
        %477 = vmatmul.mubr.f32.gmra.mrb[0].mxu0 %v476
        %v478 = vpop.f32.mrb[0].mxu0
        %v479 = vadd.f32 0.0, %v478
        %v480 = vpop.f32.mrb[0].mxu0
        %v481 = vand.u32 %v373, 4294901760
        %v482 = vsub.f32 %v373, %v481
        %v483 = vand.u32 %v482, 4294901760
        %v484 = vsub.f32 %v482, %v483
        %v485 = vand.u32 %v484, 4294901760
        %486 = vmatprep.mubr.f32.mxu0 %v485
        %v487 = vand.u32 %v337, 4294901760
        %v488 = vsub.f32 %v337, %v487
        %v489 = vand.u32 %v488, 4294901760
        %v490 = vsub.f32 %v488, %v489
        %v491 = vand.u32 %v490, 4294901760
        %492 = vmatmul.mubr.f32.gmra.mrb[0].mxu0 %v491
        %v493 = vpop.f32.mrb[0].mxu0
        %v494 = vadd.f32 0.0, %v493
        %v495 = vpop.f32.mrb[0].mxu0
        %496 = vdwg.mxu0
        %497 = vmatprep.subr.mxu0 0.0
        %v498 = vand.u32 %v341, 4294901760
        %v499 = vsub.f32 %v341, %v498
        %v500 = vand.u32 %v499, 4294901760
        %v501 = vsub.f32 %v499, %v500
        %v502 = vand.u32 %v501, 4294901760
        %503 = vmatpush1.msra.mxu0 %v502
        %504 = vmatprep.subr.mxu0 0.0
        %v505 = vand.u32 %v342, 4294901760
        %v506 = vsub.f32 %v342, %v505
        %v507 = vand.u32 %v506, 4294901760
        %v508 = vsub.f32 %v506, %v507
        %v509 = vand.u32 %v508, 4294901760
        %510 = vmatpush1.msra.mxu0 %v509
        %511 = vmatprep.subr.mxu0 0.0
        %v512 = vand.u32 %v343, 4294901760
        %v513 = vsub.f32 %v343, %v512
        %v514 = vand.u32 %v513, 4294901760
        %v515 = vsub.f32 %v513, %v514
        %v516 = vand.u32 %v515, 4294901760
        %517 = vmatpush1.msra.mxu0 %v516
        %518 = vmatprep.subr.mxu0 0.0
        %v519 = vand.u32 %v344, 4294901760
        %v520 = vsub.f32 %v344, %v519
        %v521 = vand.u32 %v520, 4294901760
        %v522 = vsub.f32 %v520, %v521
        %v523 = vand.u32 %v522, 4294901760
        %524 = vmatpush1.msra.mxu0 %v523
        %525 = vmatprep.subr.mxu0 0.0
        %v526 = vand.u32 %v345, 4294901760
        %v527 = vsub.f32 %v345, %v526
        %v528 = vand.u32 %v527, 4294901760
        %v529 = vsub.f32 %v527, %v528
        %v530 = vand.u32 %v529, 4294901760
        %531 = vmatpush1.msra.mxu0 %v530
        %532 = vmatprep.subr.mxu0 0.0
        %v533 = vand.u32 %v346, 4294901760
        %v534 = vsub.f32 %v346, %v533
        %v535 = vand.u32 %v534, 4294901760
        %v536 = vsub.f32 %v534, %v535
        %v537 = vand.u32 %v536, 4294901760
        %538 = vmatpush1.msra.mxu0 %v537
        %539 = vmatprep.subr.mxu0 0.0
        %v540 = vand.u32 %v347, 4294901760
        %v541 = vsub.f32 %v347, %v540
        %v542 = vand.u32 %v541, 4294901760
        %v543 = vsub.f32 %v541, %v542
        %v544 = vand.u32 %v543, 4294901760
        %545 = vmatpush1.msra.mxu0 %v544
        %546 = vmatprep.subr.mxu0 0.0
        %v547 = vand.u32 %v348, 4294901760
        %v548 = vsub.f32 %v348, %v547
        %v549 = vand.u32 %v548, 4294901760
        %v550 = vsub.f32 %v548, %v549
        %v551 = vand.u32 %v550, 4294901760
        %552 = vmatpush1.msra.mxu0 %v551
        %553 = vmatprep.subr.mxu0 0.0
        %v554 = vand.u32 %v349, 4294901760
        %v555 = vsub.f32 %v349, %v554
        %v556 = vand.u32 %v555, 4294901760
        %v557 = vsub.f32 %v555, %v556
        %v558 = vand.u32 %v557, 4294901760
        %559 = vmatpush1.msra.mxu0 %v558
        %560 = vmatprep.subr.mxu0 0.0
        %v561 = vand.u32 %v350, 4294901760
        %v562 = vsub.f32 %v350, %v561
        %v563 = vand.u32 %v562, 4294901760
        %v564 = vsub.f32 %v562, %v563
        %v565 = vand.u32 %v564, 4294901760
        %566 = vmatpush1.msra.mxu0 %v565
        %567 = vmatprep.subr.mxu0 0.0
        %v568 = vand.u32 %v351, 4294901760
        %v569 = vsub.f32 %v351, %v568
        %v570 = vand.u32 %v569, 4294901760
        %v571 = vsub.f32 %v569, %v570
        %v572 = vand.u32 %v571, 4294901760
        %573 = vmatpush1.msra.mxu0 %v572
        %574 = vmatprep.subr.mxu0 0.0
        %v575 = vand.u32 %v352, 4294901760
        %v576 = vsub.f32 %v352, %v575
        %v577 = vand.u32 %v576, 4294901760
        %v578 = vsub.f32 %v576, %v577
        %v579 = vand.u32 %v578, 4294901760
        %580 = vmatpush1.msra.mxu0 %v579
        %581 = vmatprep.subr.mxu0 0.0
        %v582 = vand.u32 %v353, 4294901760
        %v583 = vsub.f32 %v353, %v582
        %v584 = vand.u32 %v583, 4294901760
        %v585 = vsub.f32 %v583, %v584
        %v586 = vand.u32 %v585, 4294901760
        %587 = vmatpush1.msra.mxu0 %v586
        %588 = vmatprep.subr.mxu0 0.0
        %v589 = vand.u32 %v354, 4294901760
        %v590 = vsub.f32 %v354, %v589
        %v591 = vand.u32 %v590, 4294901760
        %v592 = vsub.f32 %v590, %v591
        %v593 = vand.u32 %v592, 4294901760
        %594 = vmatpush1.msra.mxu0 %v593
        %595 = vmatprep.subr.mxu0 0.0
        %v596 = vand.u32 %v355, 4294901760
        %v597 = vsub.f32 %v355, %v596
        %v598 = vand.u32 %v597, 4294901760
        %v599 = vsub.f32 %v597, %v598
        %v600 = vand.u32 %v599, 4294901760
        %601 = vmatpush1.msra.mxu0 %v600
        %602 = vmatprep.subr.mxu0 0.0
        %v603 = vand.u32 %v356, 4294901760
        %v604 = vsub.f32 %v356, %v603
        %v605 = vand.u32 %v604, 4294901760
        %v606 = vsub.f32 %v604, %v605
        %v607 = vand.u32 %v606, 4294901760
        %608 = vmatpush1.msra.mxu0 %v607
        %609 = vmatprep.subr.mxu0 0.0
        %v610 = vand.u32 %v357, 4294901760
        %v611 = vsub.f32 %v357, %v610
        %v612 = vand.u32 %v611, 4294901760
        %v613 = vsub.f32 %v611, %v612
        %v614 = vand.u32 %v613, 4294901760
        %615 = vmatpush1.msra.mxu0 %v614
        %616 = vmatprep.subr.mxu0 0.0
        %v617 = vand.u32 %v358, 4294901760
        %v618 = vsub.f32 %v358, %v617
        %v619 = vand.u32 %v618, 4294901760
        %v620 = vsub.f32 %v618, %v619
        %v621 = vand.u32 %v620, 4294901760
        %622 = vmatpush1.msra.mxu0 %v621
        %623 = vmatprep.subr.mxu0 0.0
        %v624 = vand.u32 %v359, 4294901760
        %v625 = vsub.f32 %v359, %v624
        %v626 = vand.u32 %v625, 4294901760
        %v627 = vsub.f32 %v625, %v626
        %v628 = vand.u32 %v627, 4294901760
        %629 = vmatpush1.msra.mxu0 %v628
        %630 = vmatprep.subr.mxu0 0.0
        %v631 = vand.u32 %v360, 4294901760
        %v632 = vsub.f32 %v360, %v631
        %v633 = vand.u32 %v632, 4294901760
        %v634 = vsub.f32 %v632, %v633
        %v635 = vand.u32 %v634, 4294901760
        %636 = vmatpush1.msra.mxu0 %v635
        %637 = vmatprep.subr.mxu0 0.0
        %v638 = vand.u32 %v361, 4294901760
        %v639 = vsub.f32 %v361, %v638
        %v640 = vand.u32 %v639, 4294901760
        %v641 = vsub.f32 %v639, %v640
        %v642 = vand.u32 %v641, 4294901760
        %643 = vmatpush1.msra.mxu0 %v642
        %644 = vmatprep.subr.mxu0 0.0
        %v645 = vand.u32 %v362, 4294901760
        %v646 = vsub.f32 %v362, %v645
        %v647 = vand.u32 %v646, 4294901760
        %v648 = vsub.f32 %v646, %v647
        %v649 = vand.u32 %v648, 4294901760
        %650 = vmatpush1.msra.mxu0 %v649
        %651 = vmatprep.subr.mxu0 0.0
        %v652 = vand.u32 %v363, 4294901760
        %v653 = vsub.f32 %v363, %v652
        %v654 = vand.u32 %v653, 4294901760
        %v655 = vsub.f32 %v653, %v654
        %v656 = vand.u32 %v655, 4294901760
        %657 = vmatpush1.msra.mxu0 %v656
        %658 = vmatprep.subr.mxu0 0.0
        %v659 = vand.u32 %v364, 4294901760
        %v660 = vsub.f32 %v364, %v659
        %v661 = vand.u32 %v660, 4294901760
        %v662 = vsub.f32 %v660, %v661
        %v663 = vand.u32 %v662, 4294901760
        %664 = vmatpush1.msra.mxu0 %v663
        %665 = vmatprep.subr.mxu0 0.0
        %v666 = vand.u32 %v365, 4294901760
        %v667 = vsub.f32 %v365, %v666
        %v668 = vand.u32 %v667, 4294901760
        %v669 = vsub.f32 %v667, %v668
        %v670 = vand.u32 %v669, 4294901760
        %671 = vmatpush1.msra.mxu0 %v670
        %672 = vmatprep.subr.mxu0 0.0
        %v673 = vand.u32 %v366, 4294901760
        %v674 = vsub.f32 %v366, %v673
        %v675 = vand.u32 %v674, 4294901760
        %v676 = vsub.f32 %v674, %v675
        %v677 = vand.u32 %v676, 4294901760
        %678 = vmatpush1.msra.mxu0 %v677
        %679 = vmatprep.subr.mxu0 0.0
        %v680 = vand.u32 %v367, 4294901760
        %v681 = vsub.f32 %v367, %v680
        %v682 = vand.u32 %v681, 4294901760
        %v683 = vsub.f32 %v681, %v682
        %v684 = vand.u32 %v683, 4294901760
        %685 = vmatpush1.msra.mxu0 %v684
        %686 = vmatprep.subr.mxu0 0.0
        %687 = vmatpush1.msra.mxu0 0.0
        %688 = vmatprep.subr.mxu0 0.0
        %689 = vmatpush1.msra.mxu0 0.0
        %690 = vmatprep.subr.mxu0 0.0
        %691 = vmatpush1.msra.mxu0 0.0
        %692 = vmatprep.subr.mxu0 0.0
        %693 = vmatpush1.msra.mxu0 0.0
        %694 = vmatprep.subr.mxu0 0.0
        %695 = vmatpush1.msra.mxu0 0.0
        %v696 = vand.u32 %v370, 4294901760
        %697 = vmatprep.mubr.f32.mxu0 %v696
        %v698 = vand.u32 %v336, 4294901760
        %699 = vmatmul.mubr.f32.gmra.mrb[0].mxu0 %v698
        %v700 = vpop.f32.mrb[0].mxu0
        %v701 = vadd.f32 %v479, %v700
        %v702 = vpop.f32.mrb[0].mxu0
        %v703 = vand.u32 %v373, 4294901760
        %704 = vmatprep.mubr.f32.mxu0 %v703
        %v705 = vand.u32 %v337, 4294901760
        %706 = vmatmul.mubr.f32.gmra.mrb[0].mxu0 %v705
        %v707 = vpop.f32.mrb[0].mxu0
        %v708 = vadd.f32 %v494, %v707
        %v709 = vpop.f32.mrb[0].mxu0
        %710 = vdwg.mxu0
        %711 = vmatprep.subr.mxu0 0.0
        %v712 = vand.u32 %v341, 4294901760
        %v713 = vsub.f32 %v341, %v712
        %714 = vmatpush1.msra.mxu0 %v713
        %715 = vmatprep.subr.mxu0 0.0
        %v716 = vand.u32 %v342, 4294901760
        %v717 = vsub.f32 %v342, %v716
        %718 = vmatpush1.msra.mxu0 %v717
        %719 = vmatprep.subr.mxu0 0.0
        %v720 = vand.u32 %v343, 4294901760
        %v721 = vsub.f32 %v343, %v720
        %722 = vmatpush1.msra.mxu0 %v721
        %723 = vmatprep.subr.mxu0 0.0
        %v724 = vand.u32 %v344, 4294901760
        %v725 = vsub.f32 %v344, %v724
        %726 = vmatpush1.msra.mxu0 %v725
        %727 = vmatprep.subr.mxu0 0.0
        %v728 = vand.u32 %v345, 4294901760
        %v729 = vsub.f32 %v345, %v728
        %730 = vmatpush1.msra.mxu0 %v729
        %731 = vmatprep.subr.mxu0 0.0
        %v732 = vand.u32 %v346, 4294901760
        %v733 = vsub.f32 %v346, %v732
        %734 = vmatpush1.msra.mxu0 %v733
        %735 = vmatprep.subr.mxu0 0.0
        %v736 = vand.u32 %v347, 4294901760
        %v737 = vsub.f32 %v347, %v736
        %738 = vmatpush1.msra.mxu0 %v737
        %739 = vmatprep.subr.mxu0 0.0
        %v740 = vand.u32 %v348, 4294901760
        %v741 = vsub.f32 %v348, %v740
        %742 = vmatpush1.msra.mxu0 %v741
        %743 = vmatprep.subr.mxu0 0.0
        %v744 = vand.u32 %v349, 4294901760
        %v745 = vsub.f32 %v349, %v744
        %746 = vmatpush1.msra.mxu0 %v745
        %747 = vmatprep.subr.mxu0 0.0
        %v748 = vand.u32 %v350, 4294901760
        %v749 = vsub.f32 %v350, %v748
        %750 = vmatpush1.msra.mxu0 %v749
        %751 = vmatprep.subr.mxu0 0.0
        %v752 = vand.u32 %v351, 4294901760
        %v753 = vsub.f32 %v351, %v752
        %754 = vmatpush1.msra.mxu0 %v753
        %755 = vmatprep.subr.mxu0 0.0
        %v756 = vand.u32 %v352, 4294901760
        %v757 = vsub.f32 %v352, %v756
        %758 = vmatpush1.msra.mxu0 %v757
        %759 = vmatprep.subr.mxu0 0.0
        %v760 = vand.u32 %v353, 4294901760
        %v761 = vsub.f32 %v353, %v760
        %762 = vmatpush1.msra.mxu0 %v761
        %763 = vmatprep.subr.mxu0 0.0
        %v764 = vand.u32 %v354, 4294901760
        %v765 = vsub.f32 %v354, %v764
        %766 = vmatpush1.msra.mxu0 %v765
        %767 = vmatprep.subr.mxu0 0.0
        %v768 = vand.u32 %v355, 4294901760
        %v769 = vsub.f32 %v355, %v768
        %770 = vmatpush1.msra.mxu0 %v769
        %771 = vmatprep.subr.mxu0 0.0
        %v772 = vand.u32 %v356, 4294901760
        %v773 = vsub.f32 %v356, %v772
        %774 = vmatpush1.msra.mxu0 %v773
        %775 = vmatprep.subr.mxu0 0.0
        %v776 = vand.u32 %v357, 4294901760
        %v777 = vsub.f32 %v357, %v776
        %778 = vmatpush1.msra.mxu0 %v777
        %779 = vmatprep.subr.mxu0 0.0
        %v780 = vand.u32 %v358, 4294901760
        %v781 = vsub.f32 %v358, %v780
        %782 = vmatpush1.msra.mxu0 %v781
        %783 = vmatprep.subr.mxu0 0.0
        %v784 = vand.u32 %v359, 4294901760
        %v785 = vsub.f32 %v359, %v784
        %786 = vmatpush1.msra.mxu0 %v785
        %787 = vmatprep.subr.mxu0 0.0
        %v788 = vand.u32 %v360, 4294901760
        %v789 = vsub.f32 %v360, %v788
        %790 = vmatpush1.msra.mxu0 %v789
        %791 = vmatprep.subr.mxu0 0.0
        %v792 = vand.u32 %v361, 4294901760
        %v793 = vsub.f32 %v361, %v792
        %794 = vmatpush1.msra.mxu0 %v793
        %795 = vmatprep.subr.mxu0 0.0
        %v796 = vand.u32 %v362, 4294901760
        %v797 = vsub.f32 %v362, %v796
        %798 = vmatpush1.msra.mxu0 %v797
        %799 = vmatprep.subr.mxu0 0.0
        %v800 = vand.u32 %v363, 4294901760
        %v801 = vsub.f32 %v363, %v800
        %802 = vmatpush1.msra.mxu0 %v801
        %803 = vmatprep.subr.mxu0 0.0
        %v804 = vand.u32 %v364, 4294901760
        %v805 = vsub.f32 %v364, %v804
        %806 = vmatpush1.msra.mxu0 %v805
        %807 = vmatprep.subr.mxu0 0.0
        %v808 = vand.u32 %v365, 4294901760
        %v809 = vsub.f32 %v365, %v808
        %810 = vmatpush1.msra.mxu0 %v809
        %811 = vmatprep.subr.mxu0 0.0
        %v812 = vand.u32 %v366, 4294901760
        %v813 = vsub.f32 %v366, %v812
        %814 = vmatpush1.msra.mxu0 %v813
        %815 = vmatprep.subr.mxu0 0.0
        %v816 = vand.u32 %v367, 4294901760
        %v817 = vsub.f32 %v367, %v816
        %818 = vmatpush1.msra.mxu0 %v817
        %819 = vmatprep.subr.mxu0 0.0
        %820 = vmatpush1.msra.mxu0 0.0
        %821 = vmatprep.subr.mxu0 0.0
        %822 = vmatpush1.msra.mxu0 0.0
        %823 = vmatprep.subr.mxu0 0.0
        %824 = vmatpush1.msra.mxu0 0.0
        %825 = vmatprep.subr.mxu0 0.0
        %826 = vmatpush1.msra.mxu0 0.0
        %827 = vmatprep.subr.mxu0 0.0
        %828 = vmatpush1.msra.mxu0 0.0
        %v829 = vand.u32 %v370, 4294901760
        %v830 = vsub.f32 %v370, %v829
        %831 = vmatprep.mubr.f32.mxu0 %v830
        %v832 = vand.u32 %v336, 4294901760
        %v833 = vsub.f32 %v336, %v832
        %834 = vmatmul.mubr.f32.gmra.mrb[0].mxu0 %v833
        %v835 = vpop.f32.mrb[0].mxu0
        %v836 = vadd.f32 %v701, %v835
        %v837 = vpop.f32.mrb[0].mxu0
        %v838 = vand.u32 %v373, 4294901760
        %v839 = vsub.f32 %v373, %v838
        %840 = vmatprep.mubr.f32.mxu0 %v839
        %v841 = vand.u32 %v337, 4294901760
        %v842 = vsub.f32 %v337, %v841
        %843 = vmatmul.mubr.f32.gmra.mrb[0].mxu0 %v842
        %v844 = vpop.f32.mrb[0].mxu0
        %v845 = vadd.f32 %v708, %v844
        %v846 = vpop.f32.mrb[0].mxu0
        %847 = vdwg.mxu0
        %848 = vmatprep.subr.mxu0 0.0
        %v849 = vand.u32 %v341, 4294901760
        %850 = vmatpush1.msra.mxu0 %v849
        %851 = vmatprep.subr.mxu0 0.0
        %v852 = vand.u32 %v342, 4294901760
        %853 = vmatpush1.msra.mxu0 %v852
        %854 = vmatprep.subr.mxu0 0.0
        %v855 = vand.u32 %v343, 4294901760
        %856 = vmatpush1.msra.mxu0 %v855
        %857 = vmatprep.subr.mxu0 0.0
        %v858 = vand.u32 %v344, 4294901760
        %859 = vmatpush1.msra.mxu0 %v858
        %860 = vmatprep.subr.mxu0 0.0
        %v861 = vand.u32 %v345, 4294901760
        %862 = vmatpush1.msra.mxu0 %v861
        %863 = vmatprep.subr.mxu0 0.0
        %v864 = vand.u32 %v346, 4294901760
        %865 = vmatpush1.msra.mxu0 %v864
        %866 = vmatprep.subr.mxu0 0.0
        %v867 = vand.u32 %v347, 4294901760
        %868 = vmatpush1.msra.mxu0 %v867
        %869 = vmatprep.subr.mxu0 0.0
        %v870 = vand.u32 %v348, 4294901760
        %871 = vmatpush1.msra.mxu0 %v870
        %872 = vmatprep.subr.mxu0 0.0
        %v873 = vand.u32 %v349, 4294901760
        %874 = vmatpush1.msra.mxu0 %v873
        %875 = vmatprep.subr.mxu0 0.0
        %v876 = vand.u32 %v350, 4294901760
        %877 = vmatpush1.msra.mxu0 %v876
        %878 = vmatprep.subr.mxu0 0.0
        %v879 = vand.u32 %v351, 4294901760
        %880 = vmatpush1.msra.mxu0 %v879
        %881 = vmatprep.subr.mxu0 0.0
        %v882 = vand.u32 %v352, 4294901760
        %883 = vmatpush1.msra.mxu0 %v882
        %884 = vmatprep.subr.mxu0 0.0
        %v885 = vand.u32 %v353, 4294901760
        %886 = vmatpush1.msra.mxu0 %v885
        %887 = vmatprep.subr.mxu0 0.0
        %v888 = vand.u32 %v354, 4294901760
        %889 = vmatpush1.msra.mxu0 %v888
        %890 = vmatprep.subr.mxu0 0.0
        %v891 = vand.u32 %v355, 4294901760
        %892 = vmatpush1.msra.mxu0 %v891
        %893 = vmatprep.subr.mxu0 0.0
        %v894 = vand.u32 %v356, 4294901760
        %895 = vmatpush1.msra.mxu0 %v894
        %896 = vmatprep.subr.mxu0 0.0
        %v897 = vand.u32 %v357, 4294901760
        %898 = vmatpush1.msra.mxu0 %v897
        %899 = vmatprep.subr.mxu0 0.0
        %v900 = vand.u32 %v358, 4294901760
        %901 = vmatpush1.msra.mxu0 %v900
        %902 = vmatprep.subr.mxu0 0.0
        %v903 = vand.u32 %v359, 4294901760
        %904 = vmatpush1.msra.mxu0 %v903
        %905 = vmatprep.subr.mxu0 0.0
        %v906 = vand.u32 %v360, 4294901760
        %907 = vmatpush1.msra.mxu0 %v906
        %908 = vmatprep.subr.mxu0 0.0
        %v909 = vand.u32 %v361, 4294901760
        %910 = vmatpush1.msra.mxu0 %v909
        %911 = vmatprep.subr.mxu0 0.0
        %v912 = vand.u32 %v362, 4294901760
        %913 = vmatpush1.msra.mxu0 %v912
        %914 = vmatprep.subr.mxu0 0.0
        %v915 = vand.u32 %v363, 4294901760
        %916 = vmatpush1.msra.mxu0 %v915
        %917 = vmatprep.subr.mxu0 0.0
        %v918 = vand.u32 %v364, 4294901760
        %919 = vmatpush1.msra.mxu0 %v918
        %920 = vmatprep.subr.mxu0 0.0
        %v921 = vand.u32 %v365, 4294901760
        %922 = vmatpush1.msra.mxu0 %v921
        %923 = vmatprep.subr.mxu0 0.0
        %v924 = vand.u32 %v366, 4294901760
        %925 = vmatpush1.msra.mxu0 %v924
        %926 = vmatprep.subr.mxu0 0.0
        %v927 = vand.u32 %v367, 4294901760
        %928 = vmatpush1.msra.mxu0 %v927
        %929 = vmatprep.subr.mxu0 0.0
        %930 = vmatpush1.msra.mxu0 0.0
        %931 = vmatprep.subr.mxu0 0.0
        %932 = vmatpush1.msra.mxu0 0.0
        %933 = vmatprep.subr.mxu0 0.0
        %934 = vmatpush1.msra.mxu0 0.0
        %935 = vmatprep.subr.mxu0 0.0
        %936 = vmatpush1.msra.mxu0 0.0
        %937 = vmatprep.subr.mxu0 0.0
        %938 = vmatpush1.msra.mxu0 0.0
        %v939 = vand.u32 %v370, 4294901760
        %v940 = vsub.f32 %v370, %v939
        %v941 = vand.u32 %v940, 4294901760
        %942 = vmatprep.mubr.f32.mxu0 %v941
        %v943 = vand.u32 %v336, 4294901760
        %v944 = vsub.f32 %v336, %v943
        %v945 = vand.u32 %v944, 4294901760
        %946 = vmatmul.mubr.f32.gmra.mrb[0].mxu0 %v945
        %v947 = vpop.f32.mrb[0].mxu0
        %v948 = vadd.f32 %v836, %v947
        %v949 = vpop.f32.mrb[0].mxu0
        %v950 = vand.u32 %v373, 4294901760
        %v951 = vsub.f32 %v373, %v950
        %v952 = vand.u32 %v951, 4294901760
        %953 = vmatprep.mubr.f32.mxu0 %v952
        %v954 = vand.u32 %v337, 4294901760
        %v955 = vsub.f32 %v337, %v954
        %v956 = vand.u32 %v955, 4294901760
        %957 = vmatmul.mubr.f32.gmra.mrb[0].mxu0 %v956
        %v958 = vpop.f32.mrb[0].mxu0
        %v959 = vadd.f32 %v845, %v958
        %v960 = vpop.f32.mrb[0].mxu0
        %961 = vdwg.mxu0
        %962 = vmatprep.subr.mxu0 0.0
        %v963 = vand.u32 %v341, 4294901760
        %v964 = vsub.f32 %v341, %v963
        %v965 = vand.u32 %v964, 4294901760
        %966 = vmatpush1.msra.mxu0 %v965
        %967 = vmatprep.subr.mxu0 0.0
        %v968 = vand.u32 %v342, 4294901760
        %v969 = vsub.f32 %v342, %v968
        %v970 = vand.u32 %v969, 4294901760
        %971 = vmatpush1.msra.mxu0 %v970
        %972 = vmatprep.subr.mxu0 0.0
        %v973 = vand.u32 %v343, 4294901760
        %v974 = vsub.f32 %v343, %v973
        %v975 = vand.u32 %v974, 4294901760
        %976 = vmatpush1.msra.mxu0 %v975
        %977 = vmatprep.subr.mxu0 0.0
        %v978 = vand.u32 %v344, 4294901760
        %v979 = vsub.f32 %v344, %v978
        %v980 = vand.u32 %v979, 4294901760
        %981 = vmatpush1.msra.mxu0 %v980
        %982 = vmatprep.subr.mxu0 0.0
        %v983 = vand.u32 %v345, 4294901760
        %v984 = vsub.f32 %v345, %v983
        %v985 = vand.u32 %v984, 4294901760
        %986 = vmatpush1.msra.mxu0 %v985
        %987 = vmatprep.subr.mxu0 0.0
        %v988 = vand.u32 %v346, 4294901760
        %v989 = vsub.f32 %v346, %v988
        %v990 = vand.u32 %v989, 4294901760
        %991 = vmatpush1.msra.mxu0 %v990
        %992 = vmatprep.subr.mxu0 0.0
        %v993 = vand.u32 %v347, 4294901760
        %v994 = vsub.f32 %v347, %v993
        %v995 = vand.u32 %v994, 4294901760
        %996 = vmatpush1.msra.mxu0 %v995
        %997 = vmatprep.subr.mxu0 0.0
        %v998 = vand.u32 %v348, 4294901760
        %v999 = vsub.f32 %v348, %v998
        %v1000 = vand.u32 %v999, 4294901760
        %1001 = vmatpush1.msra.mxu0 %v1000
        %1002 = vmatprep.subr.mxu0 0.0
        %v1003 = vand.u32 %v349, 4294901760
        %v1004 = vsub.f32 %v349, %v1003
        %v1005 = vand.u32 %v1004, 4294901760
        %1006 = vmatpush1.msra.mxu0 %v1005
        %1007 = vmatprep.subr.mxu0 0.0
        %v1008 = vand.u32 %v350, 4294901760
        %v1009 = vsub.f32 %v350, %v1008
        %v1010 = vand.u32 %v1009, 4294901760
        %1011 = vmatpush1.msra.mxu0 %v1010
        %1012 = vmatprep.subr.mxu0 0.0
        %v1013 = vand.u32 %v351, 4294901760
        %v1014 = vsub.f32 %v351, %v1013
        %v1015 = vand.u32 %v1014, 4294901760
        %1016 = vmatpush1.msra.mxu0 %v1015
        %1017 = vmatprep.subr.mxu0 0.0
        %v1018 = vand.u32 %v352, 4294901760
        %v1019 = vsub.f32 %v352, %v1018
        %v1020 = vand.u32 %v1019, 4294901760
        %1021 = vmatpush1.msra.mxu0 %v1020
        %1022 = vmatprep.subr.mxu0 0.0
        %v1023 = vand.u32 %v353, 4294901760
        %v1024 = vsub.f32 %v353, %v1023
        %v1025 = vand.u32 %v1024, 4294901760
        %1026 = vmatpush1.msra.mxu0 %v1025
        %1027 = vmatprep.subr.mxu0 0.0
        %v1028 = vand.u32 %v354, 4294901760
        %v1029 = vsub.f32 %v354, %v1028
        %v1030 = vand.u32 %v1029, 4294901760
        %1031 = vmatpush1.msra.mxu0 %v1030
        %1032 = vmatprep.subr.mxu0 0.0
        %v1033 = vand.u32 %v355, 4294901760
        %v1034 = vsub.f32 %v355, %v1033
        %v1035 = vand.u32 %v1034, 4294901760
        %1036 = vmatpush1.msra.mxu0 %v1035
        %1037 = vmatprep.subr.mxu0 0.0
        %v1038 = vand.u32 %v356, 4294901760
        %v1039 = vsub.f32 %v356, %v1038
        %v1040 = vand.u32 %v1039, 4294901760
        %1041 = vmatpush1.msra.mxu0 %v1040
        %1042 = vmatprep.subr.mxu0 0.0
        %v1043 = vand.u32 %v357, 4294901760
        %v1044 = vsub.f32 %v357, %v1043
        %v1045 = vand.u32 %v1044, 4294901760
        %1046 = vmatpush1.msra.mxu0 %v1045
        %1047 = vmatprep.subr.mxu0 0.0
        %v1048 = vand.u32 %v358, 4294901760
        %v1049 = vsub.f32 %v358, %v1048
        %v1050 = vand.u32 %v1049, 4294901760
        %1051 = vmatpush1.msra.mxu0 %v1050
        %1052 = vmatprep.subr.mxu0 0.0
        %v1053 = vand.u32 %v359, 4294901760
        %v1054 = vsub.f32 %v359, %v1053
        %v1055 = vand.u32 %v1054, 4294901760
        %1056 = vmatpush1.msra.mxu0 %v1055
        %1057 = vmatprep.subr.mxu0 0.0
        %v1058 = vand.u32 %v360, 4294901760
        %v1059 = vsub.f32 %v360, %v1058
        %v1060 = vand.u32 %v1059, 4294901760
        %1061 = vmatpush1.msra.mxu0 %v1060
        %1062 = vmatprep.subr.mxu0 0.0
        %v1063 = vand.u32 %v361, 4294901760
        %v1064 = vsub.f32 %v361, %v1063
        %v1065 = vand.u32 %v1064, 4294901760
        %1066 = vmatpush1.msra.mxu0 %v1065
        %1067 = vmatprep.subr.mxu0 0.0
        %v1068 = vand.u32 %v362, 4294901760
        %v1069 = vsub.f32 %v362, %v1068
        %v1070 = vand.u32 %v1069, 4294901760
        %1071 = vmatpush1.msra.mxu0 %v1070
        %1072 = vmatprep.subr.mxu0 0.0
        %v1073 = vand.u32 %v363, 4294901760
        %v1074 = vsub.f32 %v363, %v1073
        %v1075 = vand.u32 %v1074, 4294901760
        %1076 = vmatpush1.msra.mxu0 %v1075
        %1077 = vmatprep.subr.mxu0 0.0
        %v1078 = vand.u32 %v364, 4294901760
        %v1079 = vsub.f32 %v364, %v1078
        %v1080 = vand.u32 %v1079, 4294901760
        %1081 = vmatpush1.msra.mxu0 %v1080
        %1082 = vmatprep.subr.mxu0 0.0
        %v1083 = vand.u32 %v365, 4294901760
        %v1084 = vsub.f32 %v365, %v1083
        %v1085 = vand.u32 %v1084, 4294901760
        %1086 = vmatpush1.msra.mxu0 %v1085
        %1087 = vmatprep.subr.mxu0 0.0
        %v1088 = vand.u32 %v366, 4294901760
        %v1089 = vsub.f32 %v366, %v1088
        %v1090 = vand.u32 %v1089, 4294901760
        %1091 = vmatpush1.msra.mxu0 %v1090
        %1092 = vmatprep.subr.mxu0 0.0
        %v1093 = vand.u32 %v367, 4294901760
        %v1094 = vsub.f32 %v367, %v1093
        %v1095 = vand.u32 %v1094, 4294901760
        %1096 = vmatpush1.msra.mxu0 %v1095
        %1097 = vmatprep.subr.mxu0 0.0
        %1098 = vmatpush1.msra.mxu0 0.0
        %1099 = vmatprep.subr.mxu0 0.0
        %1100 = vmatpush1.msra.mxu0 0.0
        %1101 = vmatprep.subr.mxu0 0.0
        %1102 = vmatpush1.msra.mxu0 0.0
        %1103 = vmatprep.subr.mxu0 0.0
        %1104 = vmatpush1.msra.mxu0 0.0
        %1105 = vmatprep.subr.mxu0 0.0
        %1106 = vmatpush1.msra.mxu0 0.0
        %v1107 = vand.u32 %v370, 4294901760
        %1108 = vmatprep.mubr.f32.mxu0 %v1107
        %v1109 = vand.u32 %v336, 4294901760
        %1110 = vmatmul.mubr.f32.gmra.mrb[0].mxu0 %v1109
        %v1111 = vpop.f32.mrb[0].mxu0
        %v1112 = vadd.f32 %v948, %v1111
        %v1113 = vpop.f32.mrb[0].mxu0
        %v1114 = vand.u32 %v373, 4294901760
        %1115 = vmatprep.mubr.f32.mxu0 %v1114
        %v1116 = vand.u32 %v337, 4294901760
        %1117 = vmatmul.mubr.f32.gmra.mrb[0].mxu0 %v1116
        %v1118 = vpop.f32.mrb[0].mxu0
        %v1119 = vadd.f32 %v959, %v1118
        %v1120 = vpop.f32.mrb[0].mxu0
        %1121 = vdwg.mxu0
        %1122 = vmatprep.subr.mxu0 0.0
        %v1123 = vand.u32 %v341, 4294901760
        %1124 = vmatpush1.msra.mxu0 %v1123
        %1125 = vmatprep.subr.mxu0 0.0
        %v1126 = vand.u32 %v342, 4294901760
        %1127 = vmatpush1.msra.mxu0 %v1126
        %1128 = vmatprep.subr.mxu0 0.0
        %v1129 = vand.u32 %v343, 4294901760
        %1130 = vmatpush1.msra.mxu0 %v1129
        %1131 = vmatprep.subr.mxu0 0.0
        %v1132 = vand.u32 %v344, 4294901760
        %1133 = vmatpush1.msra.mxu0 %v1132
        %1134 = vmatprep.subr.mxu0 0.0
        %v1135 = vand.u32 %v345, 4294901760
        %1136 = vmatpush1.msra.mxu0 %v1135
        %1137 = vmatprep.subr.mxu0 0.0
        %v1138 = vand.u32 %v346, 4294901760
        %1139 = vmatpush1.msra.mxu0 %v1138
        %1140 = vmatprep.subr.mxu0 0.0
        %v1141 = vand.u32 %v347, 4294901760
        %1142 = vmatpush1.msra.mxu0 %v1141
        %1143 = vmatprep.subr.mxu0 0.0
        %v1144 = vand.u32 %v348, 4294901760
        %1145 = vmatpush1.msra.mxu0 %v1144
        %1146 = vmatprep.subr.mxu0 0.0
        %v1147 = vand.u32 %v349, 4294901760
        %1148 = vmatpush1.msra.mxu0 %v1147
        %1149 = vmatprep.subr.mxu0 0.0
        %v1150 = vand.u32 %v350, 4294901760
        %1151 = vmatpush1.msra.mxu0 %v1150
        %1152 = vmatprep.subr.mxu0 0.0
        %v1153 = vand.u32 %v351, 4294901760
        %1154 = vmatpush1.msra.mxu0 %v1153
        %1155 = vmatprep.subr.mxu0 0.0
        %v1156 = vand.u32 %v352, 4294901760
        %1157 = vmatpush1.msra.mxu0 %v1156
        %1158 = vmatprep.subr.mxu0 0.0
        %v1159 = vand.u32 %v353, 4294901760
        %1160 = vmatpush1.msra.mxu0 %v1159
        %1161 = vmatprep.subr.mxu0 0.0
        %v1162 = vand.u32 %v354, 4294901760
        %1163 = vmatpush1.msra.mxu0 %v1162
        %1164 = vmatprep.subr.mxu0 0.0
        %v1165 = vand.u32 %v355, 4294901760
        %1166 = vmatpush1.msra.mxu0 %v1165
        %1167 = vmatprep.subr.mxu0 0.0
        %v1168 = vand.u32 %v356, 4294901760
        %1169 = vmatpush1.msra.mxu0 %v1168
        %1170 = vmatprep.subr.mxu0 0.0
        %v1171 = vand.u32 %v357, 4294901760
        %1172 = vmatpush1.msra.mxu0 %v1171
        %1173 = vmatprep.subr.mxu0 0.0
        %v1174 = vand.u32 %v358, 4294901760
        %1175 = vmatpush1.msra.mxu0 %v1174
        %1176 = vmatprep.subr.mxu0 0.0
        %v1177 = vand.u32 %v359, 4294901760
        %1178 = vmatpush1.msra.mxu0 %v1177
        %1179 = vmatprep.subr.mxu0 0.0
        %v1180 = vand.u32 %v360, 4294901760
        %1181 = vmatpush1.msra.mxu0 %v1180
        %1182 = vmatprep.subr.mxu0 0.0
        %v1183 = vand.u32 %v361, 4294901760
        %1184 = vmatpush1.msra.mxu0 %v1183
        %1185 = vmatprep.subr.mxu0 0.0
        %v1186 = vand.u32 %v362, 4294901760
        %1187 = vmatpush1.msra.mxu0 %v1186
        %1188 = vmatprep.subr.mxu0 0.0
        %v1189 = vand.u32 %v363, 4294901760
        %1190 = vmatpush1.msra.mxu0 %v1189
        %1191 = vmatprep.subr.mxu0 0.0
        %v1192 = vand.u32 %v364, 4294901760
        %1193 = vmatpush1.msra.mxu0 %v1192
        %1194 = vmatprep.subr.mxu0 0.0
        %v1195 = vand.u32 %v365, 4294901760
        %1196 = vmatpush1.msra.mxu0 %v1195
        %1197 = vmatprep.subr.mxu0 0.0
        %v1198 = vand.u32 %v366, 4294901760
        %1199 = vmatpush1.msra.mxu0 %v1198
        %1200 = vmatprep.subr.mxu0 0.0
        %v1201 = vand.u32 %v367, 4294901760
        %1202 = vmatpush1.msra.mxu0 %v1201
        %1203 = vmatprep.subr.mxu0 0.0
        %1204 = vmatpush1.msra.mxu0 0.0
        %1205 = vmatprep.subr.mxu0 0.0
        %1206 = vmatpush1.msra.mxu0 0.0
        %1207 = vmatprep.subr.mxu0 0.0
        %1208 = vmatpush1.msra.mxu0 0.0
        %1209 = vmatprep.subr.mxu0 0.0
        %1210 = vmatpush1.msra.mxu0 0.0
        %1211 = vmatprep.subr.mxu0 0.0
        %1212 = vmatpush1.msra.mxu0 0.0
        %v1213 = vand.u32 %v370, 4294901760
        %1214 = vmatprep.mubr.f32.mxu0 %v1213
        %v1215 = vand.u32 %v336, 4294901760
        %1216 = vmatmul.mubr.f32.gmra.mrb[0].mxu0 %v1215
        %v1217 = vpop.f32.mrb[0].mxu0
        %v1218 = vadd.f32 %v1112, %v1217
        %v1219 = vpop.f32.mrb[0].mxu0
        %v1220 = vand.u32 %v373, 4294901760
        %1221 = vmatprep.mubr.f32.mxu0 %v1220
        %v1222 = vand.u32 %v337, 4294901760
        %1223 = vmatmul.mubr.f32.gmra.mrb[0].mxu0 %v1222
        %v1224 = vpop.f32.mrb[0].mxu0
        %v1225 = vadd.f32 %v1119, %v1224
        %v1226 = vpop.f32.mrb[0].mxu0
        %1227 = vdwg.mxu0
        %v1228 = vld [vmem:[%s2] sm:$0x1]
        %v1230 = vlaneseq
        %v1231 = vshrl.u32 %v1230, 7
        %v1232 = vsub.s32 0, %v1231
        %v1233 = vrot.slane %v1228, %v1232
        %v1235 = vmul.f32 %v1218, %v1233
        %v1236 = vmul.f32 %v1225, %v1233
        %v1237 = vld [vmem:[%s3] sm:$0x1]
        %v1239 = vlaneseq
        %v1240 = vshrl.u32 %v1239, 7
        %v1241 = vsub.s32 0, %v1240
        %v1242 = vrot.slane %v1237, %v1241
        %v1244 = vadd.f32 %v1235, %v1242
        %v1245 = vadd.f32 %v1236, %v1242
        %v1246 = vmax.f32 %v1244, 0.0
        %v1247 = vmax.f32 %v1245, 0.0
        %v1250 = vrot.slane %v1246, 7
        %v1251 = vrot.slane %v1247, 7
        %v1252 = vsel %vm281, %v1250, %v1251
        %v1255 = vsel %vm281, 0.0, %v1250
        %v1256 = vsel %vm281, %v1251, 0.0
        %1259 = vrot.lane.b32.xlu0 %v1255, 4
        %v1260 = vpop.permute.xlu0 %1259
        %1261 = vrot.lane.b32.xlu0 %v1252, 4
        %v1262 = vpop.permute.xlu0 %1261
        %1263 = vrot.lane.b32.xlu0 %v1256, 4
        %v1264 = vpop.permute.xlu0 %1263
        %v1268 = vsel %vm300, 0.0, %v1260
        %v1269 = vsel %vm300, 0.0, %v1262
        %v1270 = vsel %vm300, 0.0, %v1264
        %v1271 = vsel %vm304, %v1268, 0.0
        %v1272 = vsel %vm304, %v1269, 0.0
        %v1273 = vsel %vm304, %v1270, 0.0
        %v1277 = vrot.slane %v1271, 1
        %v1278 = vrot.slane %v1272, 1
        %v1279 = vsel %vm311, %v1277, %v1278
        %v1280 = vrot.slane %v1273, 1
        %v1281 = vsel %vm311, %v1278, %v1280
        %1282 = vrot.lane.b32.xlu0 %v1279, 72
        %v1283 = vpop.permute.xlu0 %1282
        %1284 = vrot.lane.b32.xlu0 %v1281, 72
        %v1285 = vpop.permute.xlu0 %1284
        %v1288 = vrot.slane %v1271, 2
        %v1289 = vrot.slane %v1272, 2
        %v1290 = vsel %vm323, %v1288, %v1289
        %v1291 = vrot.slane %v1273, 2
        %v1292 = vsel %vm323, %v1289, %v1291
        %1293 = vrot.lane.b32.xlu0 %v1290, 16
        %v1294 = vpop.permute.xlu0 %1293
        %1295 = vrot.lane.b32.xlu0 %v1292, 16
        %v1296 = vpop.permute.xlu0 %1295
        %v1299 = vsel %vm335, %v1271, %v1283
        %v1300 = vsel %vm335, %v1272, %v1285
        %v1301 = vsel %vm338, %v1283, %v1294
        %v1302 = vsel %vm338, %v1285, %v1296
        %v1303 = vld [vmem:[%s4] sm:$0xff]
        %v1304 = vld [vmem:[%s4 + $0x8] sm:$0xff]
        %v1305 = vld [vmem:[%s4 + $0x10] sm:$0xff]
        %v1306 = vld [vmem:[%s4 + $0x18] sm:$0xff]
        %v1307 = vld [vmem:[%s4 + $0x20] sm:$0xff]
        %v1308 = vld [vmem:[%s4 + $0x28] sm:$0xff]
        %v1309 = vld [vmem:[%s4 + $0x30] sm:$0xff]
        %v1310 = vld [vmem:[%s4 + $0x38] sm:$0xff]
        %v1311 = vld [vmem:[%s4 + $0x40] sm:$0xff]
        %v1312 = vld [vmem:[%s4 + $0x48] sm:$0xff]
        %v1313 = vld [vmem:[%s4 + $0x50] sm:$0xff]
        %v1314 = vld [vmem:[%s4 + $0x58] sm:$0xff]
        %v1315 = vld [vmem:[%s4 + $0x60] sm:$0xff]
        %v1316 = vld [vmem:[%s4 + $0x68] sm:$0xff]
        %v1317 = vld [vmem:[%s4 + $0x70] sm:$0xff]
        %v1318 = vld [vmem:[%s4 + $0x78] sm:$0xff]
        %v1319 = vld [vmem:[%s4 + $0x80] sm:$0xff]
        %v1320 = vld [vmem:[%s4 + $0x88] sm:$0xff]
        %v1321 = vld [vmem:[%s4 + $0x90] sm:$0xff]
        %v1322 = vld [vmem:[%s4 + $0x98] sm:$0xff]
        %v1323 = vld [vmem:[%s4 + $0xa0] sm:$0xff]
        %v1324 = vld [vmem:[%s4 + $0xa8] sm:$0xff]
        %v1325 = vld [vmem:[%s4 + $0xb0] sm:$0xff]
        %v1326 = vld [vmem:[%s4 + $0xb8] sm:$0xff]
        %v1327 = vld [vmem:[%s4 + $0xc0] sm:$0xff]
        %v1328 = vld [vmem:[%s4 + $0xc8] sm:$0xff]
        %v1329 = vld [vmem:[%s4 + $0xd0] sm:$0xff]
        %v1331 = vsel %vm368, %v1301, 0
        %v1334 = vsel %vm368, %v1302, 0
        %1336 = vmatprep.subr.mxu0 0.0
        %v1337 = vand.u32 %v1303, 4294901760
        %1338 = vmatpush1.msra.mxu0 %v1337
        %1339 = vmatprep.subr.mxu0 0.0
        %v1340 = vand.u32 %v1304, 4294901760
        %1341 = vmatpush1.msra.mxu0 %v1340
        %1342 = vmatprep.subr.mxu0 0.0
        %v1343 = vand.u32 %v1305, 4294901760
        %1344 = vmatpush1.msra.mxu0 %v1343
        %1345 = vmatprep.subr.mxu0 0.0
        %v1346 = vand.u32 %v1306, 4294901760
        %1347 = vmatpush1.msra.mxu0 %v1346
        %1348 = vmatprep.subr.mxu0 0.0
        %v1349 = vand.u32 %v1307, 4294901760
        %1350 = vmatpush1.msra.mxu0 %v1349
        %1351 = vmatprep.subr.mxu0 0.0
        %v1352 = vand.u32 %v1308, 4294901760
        %1353 = vmatpush1.msra.mxu0 %v1352
        %1354 = vmatprep.subr.mxu0 0.0
        %v1355 = vand.u32 %v1309, 4294901760
        %1356 = vmatpush1.msra.mxu0 %v1355
        %1357 = vmatprep.subr.mxu0 0.0
        %v1358 = vand.u32 %v1310, 4294901760
        %1359 = vmatpush1.msra.mxu0 %v1358
        %1360 = vmatprep.subr.mxu0 0.0
        %v1361 = vand.u32 %v1311, 4294901760
        %1362 = vmatpush1.msra.mxu0 %v1361
        %1363 = vmatprep.subr.mxu0 0.0
        %v1364 = vand.u32 %v1312, 4294901760
        %1365 = vmatpush1.msra.mxu0 %v1364
        %1366 = vmatprep.subr.mxu0 0.0
        %v1367 = vand.u32 %v1313, 4294901760
        %1368 = vmatpush1.msra.mxu0 %v1367
        %1369 = vmatprep.subr.mxu0 0.0
        %v1370 = vand.u32 %v1314, 4294901760
        %1371 = vmatpush1.msra.mxu0 %v1370
        %1372 = vmatprep.subr.mxu0 0.0
        %v1373 = vand.u32 %v1315, 4294901760
        %1374 = vmatpush1.msra.mxu0 %v1373
        %1375 = vmatprep.subr.mxu0 0.0
        %v1376 = vand.u32 %v1316, 4294901760
        %1377 = vmatpush1.msra.mxu0 %v1376
        %1378 = vmatprep.subr.mxu0 0.0
        %v1379 = vand.u32 %v1317, 4294901760
        %1380 = vmatpush1.msra.mxu0 %v1379
        %1381 = vmatprep.subr.mxu0 0.0
        %v1382 = vand.u32 %v1318, 4294901760
        %1383 = vmatpush1.msra.mxu0 %v1382
        %1384 = vmatprep.subr.mxu0 0.0
        %v1385 = vand.u32 %v1319, 4294901760
        %1386 = vmatpush1.msra.mxu0 %v1385
        %1387 = vmatprep.subr.mxu0 0.0
        %v1388 = vand.u32 %v1320, 4294901760
        %1389 = vmatpush1.msra.mxu0 %v1388
        %1390 = vmatprep.subr.mxu0 0.0
        %v1391 = vand.u32 %v1321, 4294901760
        %1392 = vmatpush1.msra.mxu0 %v1391
        %1393 = vmatprep.subr.mxu0 0.0
        %v1394 = vand.u32 %v1322, 4294901760
        %1395 = vmatpush1.msra.mxu0 %v1394
        %1396 = vmatprep.subr.mxu0 0.0
        %v1397 = vand.u32 %v1323, 4294901760
        %1398 = vmatpush1.msra.mxu0 %v1397
        %1399 = vmatprep.subr.mxu0 0.0
        %v1400 = vand.u32 %v1324, 4294901760
        %1401 = vmatpush1.msra.mxu0 %v1400
        %1402 = vmatprep.subr.mxu0 0.0
        %v1403 = vand.u32 %v1325, 4294901760
        %1404 = vmatpush1.msra.mxu0 %v1403
        %1405 = vmatprep.subr.mxu0 0.0
        %v1406 = vand.u32 %v1326, 4294901760
        %1407 = vmatpush1.msra.mxu0 %v1406
        %1408 = vmatprep.subr.mxu0 0.0
        %v1409 = vand.u32 %v1327, 4294901760
        %1410 = vmatpush1.msra.mxu0 %v1409
        %1411 = vmatprep.subr.mxu0 0.0
        %v1412 = vand.u32 %v1328, 4294901760
        %1413 = vmatpush1.msra.mxu0 %v1412
        %1414 = vmatprep.subr.mxu0 0.0
        %v1415 = vand.u32 %v1329, 4294901760
        %1416 = vmatpush1.msra.mxu0 %v1415
        %1417 = vmatprep.subr.mxu0 0.0
        %1418 = vmatpush1.msra.mxu0 0.0
        %1419 = vmatprep.subr.mxu0 0.0
        %1420 = vmatpush1.msra.mxu0 0.0
        %1421 = vmatprep.subr.mxu0 0.0
        %1422 = vmatpush1.msra.mxu0 0.0
        %1423 = vmatprep.subr.mxu0 0.0
        %1424 = vmatpush1.msra.mxu0 0.0
        %1425 = vmatprep.subr.mxu0 0.0
        %1426 = vmatpush1.msra.mxu0 0.0
        %v1427 = vand.u32 %v1331, 4294901760
        %v1428 = vsub.f32 %v1331, %v1427
        %v1429 = vand.u32 %v1428, 4294901760
        %v1430 = vsub.f32 %v1428, %v1429
        %v1431 = vand.u32 %v1430, 4294901760
        %1432 = vmatprep.mubr.f32.mxu0 %v1431
        %v1433 = vand.u32 %v1299, 4294901760
        %v1434 = vsub.f32 %v1299, %v1433
        %v1435 = vand.u32 %v1434, 4294901760
        %v1436 = vsub.f32 %v1434, %v1435
        %v1437 = vand.u32 %v1436, 4294901760
        %1438 = vmatmul.mubr.f32.gmra.mrb[0].mxu0 %v1437
        %v1439 = vpop.f32.mrb[0].mxu0
        %v1440 = vadd.f32 0.0, %v1439
        %v1441 = vpop.f32.mrb[0].mxu0
        %v1442 = vand.u32 %v1334, 4294901760
        %v1443 = vsub.f32 %v1334, %v1442
        %v1444 = vand.u32 %v1443, 4294901760
        %v1445 = vsub.f32 %v1443, %v1444
        %v1446 = vand.u32 %v1445, 4294901760
        %1447 = vmatprep.mubr.f32.mxu0 %v1446
        %v1448 = vand.u32 %v1300, 4294901760
        %v1449 = vsub.f32 %v1300, %v1448
        %v1450 = vand.u32 %v1449, 4294901760
        %v1451 = vsub.f32 %v1449, %v1450
        %v1452 = vand.u32 %v1451, 4294901760
        %1453 = vmatmul.mubr.f32.gmra.mrb[0].mxu0 %v1452
        %v1454 = vpop.f32.mrb[0].mxu0
        %v1455 = vadd.f32 0.0, %v1454
        %v1456 = vpop.f32.mrb[0].mxu0
        %1457 = vdwg.mxu0
        %1458 = vmatprep.subr.mxu0 0.0
        %v1459 = vand.u32 %v1303, 4294901760
        %v1460 = vsub.f32 %v1303, %v1459
        %v1461 = vand.u32 %v1460, 4294901760
        %v1462 = vsub.f32 %v1460, %v1461
        %v1463 = vand.u32 %v1462, 4294901760
        %1464 = vmatpush1.msra.mxu0 %v1463
        %1465 = vmatprep.subr.mxu0 0.0
        %v1466 = vand.u32 %v1304, 4294901760
        %v1467 = vsub.f32 %v1304, %v1466
        %v1468 = vand.u32 %v1467, 4294901760
        %v1469 = vsub.f32 %v1467, %v1468
        %v1470 = vand.u32 %v1469, 4294901760
        %1471 = vmatpush1.msra.mxu0 %v1470
        %1472 = vmatprep.subr.mxu0 0.0
        %v1473 = vand.u32 %v1305, 4294901760
        %v1474 = vsub.f32 %v1305, %v1473
        %v1475 = vand.u32 %v1474, 4294901760
        %v1476 = vsub.f32 %v1474, %v1475
        %v1477 = vand.u32 %v1476, 4294901760
        %1478 = vmatpush1.msra.mxu0 %v1477
        %1479 = vmatprep.subr.mxu0 0.0
        %v1480 = vand.u32 %v1306, 4294901760
        %v1481 = vsub.f32 %v1306, %v1480
        %v1482 = vand.u32 %v1481, 4294901760
        %v1483 = vsub.f32 %v1481, %v1482
        %v1484 = vand.u32 %v1483, 4294901760
        %1485 = vmatpush1.msra.mxu0 %v1484
        %1486 = vmatprep.subr.mxu0 0.0
        %v1487 = vand.u32 %v1307, 4294901760
        %v1488 = vsub.f32 %v1307, %v1487
        %v1489 = vand.u32 %v1488, 4294901760
        %v1490 = vsub.f32 %v1488, %v1489
        %v1491 = vand.u32 %v1490, 4294901760
        %1492 = vmatpush1.msra.mxu0 %v1491
        %1493 = vmatprep.subr.mxu0 0.0
        %v1494 = vand.u32 %v1308, 4294901760
        %v1495 = vsub.f32 %v1308, %v1494
        %v1496 = vand.u32 %v1495, 4294901760
        %v1497 = vsub.f32 %v1495, %v1496
        %v1498 = vand.u32 %v1497, 4294901760
        %1499 = vmatpush1.msra.mxu0 %v1498
        %1500 = vmatprep.subr.mxu0 0.0
        %v1501 = vand.u32 %v1309, 4294901760
        %v1502 = vsub.f32 %v1309, %v1501
        %v1503 = vand.u32 %v1502, 4294901760
        %v1504 = vsub.f32 %v1502, %v1503
        %v1505 = vand.u32 %v1504, 4294901760
        %1506 = vmatpush1.msra.mxu0 %v1505
        %1507 = vmatprep.subr.mxu0 0.0
        %v1508 = vand.u32 %v1310, 4294901760
        %v1509 = vsub.f32 %v1310, %v1508
        %v1510 = vand.u32 %v1509, 4294901760
        %v1511 = vsub.f32 %v1509, %v1510
        %v1512 = vand.u32 %v1511, 4294901760
        %1513 = vmatpush1.msra.mxu0 %v1512
        %1514 = vmatprep.subr.mxu0 0.0
        %v1515 = vand.u32 %v1311, 4294901760
        %v1516 = vsub.f32 %v1311, %v1515
        %v1517 = vand.u32 %v1516, 4294901760
        %v1518 = vsub.f32 %v1516, %v1517
        %v1519 = vand.u32 %v1518, 4294901760
        %1520 = vmatpush1.msra.mxu0 %v1519
        %1521 = vmatprep.subr.mxu0 0.0
        %v1522 = vand.u32 %v1312, 4294901760
        %v1523 = vsub.f32 %v1312, %v1522
        %v1524 = vand.u32 %v1523, 4294901760
        %v1525 = vsub.f32 %v1523, %v1524
        %v1526 = vand.u32 %v1525, 4294901760
        %1527 = vmatpush1.msra.mxu0 %v1526
        %1528 = vmatprep.subr.mxu0 0.0
        %v1529 = vand.u32 %v1313, 4294901760
        %v1530 = vsub.f32 %v1313, %v1529
        %v1531 = vand.u32 %v1530, 4294901760
        %v1532 = vsub.f32 %v1530, %v1531
        %v1533 = vand.u32 %v1532, 4294901760
        %1534 = vmatpush1.msra.mxu0 %v1533
        %1535 = vmatprep.subr.mxu0 0.0
        %v1536 = vand.u32 %v1314, 4294901760
        %v1537 = vsub.f32 %v1314, %v1536
        %v1538 = vand.u32 %v1537, 4294901760
        %v1539 = vsub.f32 %v1537, %v1538
        %v1540 = vand.u32 %v1539, 4294901760
        %1541 = vmatpush1.msra.mxu0 %v1540
        %1542 = vmatprep.subr.mxu0 0.0
        %v1543 = vand.u32 %v1315, 4294901760
        %v1544 = vsub.f32 %v1315, %v1543
        %v1545 = vand.u32 %v1544, 4294901760
        %v1546 = vsub.f32 %v1544, %v1545
        %v1547 = vand.u32 %v1546, 4294901760
        %1548 = vmatpush1.msra.mxu0 %v1547
        %1549 = vmatprep.subr.mxu0 0.0
        %v1550 = vand.u32 %v1316, 4294901760
        %v1551 = vsub.f32 %v1316, %v1550
        %v1552 = vand.u32 %v1551, 4294901760
        %v1553 = vsub.f32 %v1551, %v1552
        %v1554 = vand.u32 %v1553, 4294901760
        %1555 = vmatpush1.msra.mxu0 %v1554
        %1556 = vmatprep.subr.mxu0 0.0
        %v1557 = vand.u32 %v1317, 4294901760
        %v1558 = vsub.f32 %v1317, %v1557
        %v1559 = vand.u32 %v1558, 4294901760
        %v1560 = vsub.f32 %v1558, %v1559
        %v1561 = vand.u32 %v1560, 4294901760
        %1562 = vmatpush1.msra.mxu0 %v1561
        %1563 = vmatprep.subr.mxu0 0.0
        %v1564 = vand.u32 %v1318, 4294901760
        %v1565 = vsub.f32 %v1318, %v1564
        %v1566 = vand.u32 %v1565, 4294901760
        %v1567 = vsub.f32 %v1565, %v1566
        %v1568 = vand.u32 %v1567, 4294901760
        %1569 = vmatpush1.msra.mxu0 %v1568
        %1570 = vmatprep.subr.mxu0 0.0
        %v1571 = vand.u32 %v1319, 4294901760
        %v1572 = vsub.f32 %v1319, %v1571
        %v1573 = vand.u32 %v1572, 4294901760
        %v1574 = vsub.f32 %v1572, %v1573
        %v1575 = vand.u32 %v1574, 4294901760
        %1576 = vmatpush1.msra.mxu0 %v1575
        %1577 = vmatprep.subr.mxu0 0.0
        %v1578 = vand.u32 %v1320, 4294901760
        %v1579 = vsub.f32 %v1320, %v1578
        %v1580 = vand.u32 %v1579, 4294901760
        %v1581 = vsub.f32 %v1579, %v1580
        %v1582 = vand.u32 %v1581, 4294901760
        %1583 = vmatpush1.msra.mxu0 %v1582
        %1584 = vmatprep.subr.mxu0 0.0
        %v1585 = vand.u32 %v1321, 4294901760
        %v1586 = vsub.f32 %v1321, %v1585
        %v1587 = vand.u32 %v1586, 4294901760
        %v1588 = vsub.f32 %v1586, %v1587
        %v1589 = vand.u32 %v1588, 4294901760
        %1590 = vmatpush1.msra.mxu0 %v1589
        %1591 = vmatprep.subr.mxu0 0.0
        %v1592 = vand.u32 %v1322, 4294901760
        %v1593 = vsub.f32 %v1322, %v1592
        %v1594 = vand.u32 %v1593, 4294901760
        %v1595 = vsub.f32 %v1593, %v1594
        %v1596 = vand.u32 %v1595, 4294901760
        %1597 = vmatpush1.msra.mxu0 %v1596
        %1598 = vmatprep.subr.mxu0 0.0
        %v1599 = vand.u32 %v1323, 4294901760
        %v1600 = vsub.f32 %v1323, %v1599
        %v1601 = vand.u32 %v1600, 4294901760
        %v1602 = vsub.f32 %v1600, %v1601
        %v1603 = vand.u32 %v1602, 4294901760
        %1604 = vmatpush1.msra.mxu0 %v1603
        %1605 = vmatprep.subr.mxu0 0.0
        %v1606 = vand.u32 %v1324, 4294901760
        %v1607 = vsub.f32 %v1324, %v1606
        %v1608 = vand.u32 %v1607, 4294901760
        %v1609 = vsub.f32 %v1607, %v1608
        %v1610 = vand.u32 %v1609, 4294901760
        %1611 = vmatpush1.msra.mxu0 %v1610
        %1612 = vmatprep.subr.mxu0 0.0
        %v1613 = vand.u32 %v1325, 4294901760
        %v1614 = vsub.f32 %v1325, %v1613
        %v1615 = vand.u32 %v1614, 4294901760
        %v1616 = vsub.f32 %v1614, %v1615
        %v1617 = vand.u32 %v1616, 4294901760
        %1618 = vmatpush1.msra.mxu0 %v1617
        %1619 = vmatprep.subr.mxu0 0.0
        %v1620 = vand.u32 %v1326, 4294901760
        %v1621 = vsub.f32 %v1326, %v1620
        %v1622 = vand.u32 %v1621, 4294901760
        %v1623 = vsub.f32 %v1621, %v1622
        %v1624 = vand.u32 %v1623, 4294901760
        %1625 = vmatpush1.msra.mxu0 %v1624
        %1626 = vmatprep.subr.mxu0 0.0
        %v1627 = vand.u32 %v1327, 4294901760
        %v1628 = vsub.f32 %v1327, %v1627
        %v1629 = vand.u32 %v1628, 4294901760
        %v1630 = vsub.f32 %v1628, %v1629
        %v1631 = vand.u32 %v1630, 4294901760
        %1632 = vmatpush1.msra.mxu0 %v1631
        %1633 = vmatprep.subr.mxu0 0.0
        %v1634 = vand.u32 %v1328, 4294901760
        %v1635 = vsub.f32 %v1328, %v1634
        %v1636 = vand.u32 %v1635, 4294901760
        %v1637 = vsub.f32 %v1635, %v1636
        %v1638 = vand.u32 %v1637, 4294901760
        %1639 = vmatpush1.msra.mxu0 %v1638
        %1640 = vmatprep.subr.mxu0 0.0
        %v1641 = vand.u32 %v1329, 4294901760
        %v1642 = vsub.f32 %v1329, %v1641
        %v1643 = vand.u32 %v1642, 4294901760
        %v1644 = vsub.f32 %v1642, %v1643
        %v1645 = vand.u32 %v1644, 4294901760
        %1646 = vmatpush1.msra.mxu0 %v1645
        %1647 = vmatprep.subr.mxu0 0.0
        %1648 = vmatpush1.msra.mxu0 0.0
        %1649 = vmatprep.subr.mxu0 0.0
        %1650 = vmatpush1.msra.mxu0 0.0
        %1651 = vmatprep.subr.mxu0 0.0
        %1652 = vmatpush1.msra.mxu0 0.0
        %1653 = vmatprep.subr.mxu0 0.0
        %1654 = vmatpush1.msra.mxu0 0.0
        %1655 = vmatprep.subr.mxu0 0.0
        %1656 = vmatpush1.msra.mxu0 0.0
        %v1657 = vand.u32 %v1331, 4294901760
        %1658 = vmatprep.mubr.f32.mxu0 %v1657
        %v1659 = vand.u32 %v1299, 4294901760
        %1660 = vmatmul.mubr.f32.gmra.mrb[0].mxu0 %v1659
        %v1661 = vpop.f32.mrb[0].mxu0
        %v1662 = vadd.f32 %v1440, %v1661
        %v1663 = vpop.f32.mrb[0].mxu0
        %v1664 = vand.u32 %v1334, 4294901760
        %1665 = vmatprep.mubr.f32.mxu0 %v1664
        %v1666 = vand.u32 %v1300, 4294901760
        %1667 = vmatmul.mubr.f32.gmra.mrb[0].mxu0 %v1666
        %v1668 = vpop.f32.mrb[0].mxu0
        %v1669 = vadd.f32 %v1455, %v1668
        %v1670 = vpop.f32.mrb[0].mxu0
        %1671 = vdwg.mxu0
        %1672 = vmatprep.subr.mxu0 0.0
        %v1673 = vand.u32 %v1303, 4294901760
        %v1674 = vsub.f32 %v1303, %v1673
        %1675 = vmatpush1.msra.mxu0 %v1674
        %1676 = vmatprep.subr.mxu0 0.0
        %v1677 = vand.u32 %v1304, 4294901760
        %v1678 = vsub.f32 %v1304, %v1677
        %1679 = vmatpush1.msra.mxu0 %v1678
        %1680 = vmatprep.subr.mxu0 0.0
        %v1681 = vand.u32 %v1305, 4294901760
        %v1682 = vsub.f32 %v1305, %v1681
        %1683 = vmatpush1.msra.mxu0 %v1682
        %1684 = vmatprep.subr.mxu0 0.0
        %v1685 = vand.u32 %v1306, 4294901760
        %v1686 = vsub.f32 %v1306, %v1685
        %1687 = vmatpush1.msra.mxu0 %v1686
        %1688 = vmatprep.subr.mxu0 0.0
        %v1689 = vand.u32 %v1307, 4294901760
        %v1690 = vsub.f32 %v1307, %v1689
        %1691 = vmatpush1.msra.mxu0 %v1690
        %1692 = vmatprep.subr.mxu0 0.0
        %v1693 = vand.u32 %v1308, 4294901760
        %v1694 = vsub.f32 %v1308, %v1693
        %1695 = vmatpush1.msra.mxu0 %v1694
        %1696 = vmatprep.subr.mxu0 0.0
        %v1697 = vand.u32 %v1309, 4294901760
        %v1698 = vsub.f32 %v1309, %v1697
        %1699 = vmatpush1.msra.mxu0 %v1698
        %1700 = vmatprep.subr.mxu0 0.0
        %v1701 = vand.u32 %v1310, 4294901760
        %v1702 = vsub.f32 %v1310, %v1701
        %1703 = vmatpush1.msra.mxu0 %v1702
        %1704 = vmatprep.subr.mxu0 0.0
        %v1705 = vand.u32 %v1311, 4294901760
        %v1706 = vsub.f32 %v1311, %v1705
        %1707 = vmatpush1.msra.mxu0 %v1706
        %1708 = vmatprep.subr.mxu0 0.0
        %v1709 = vand.u32 %v1312, 4294901760
        %v1710 = vsub.f32 %v1312, %v1709
        %1711 = vmatpush1.msra.mxu0 %v1710
        %1712 = vmatprep.subr.mxu0 0.0
        %v1713 = vand.u32 %v1313, 4294901760
        %v1714 = vsub.f32 %v1313, %v1713
        %1715 = vmatpush1.msra.mxu0 %v1714
        %1716 = vmatprep.subr.mxu0 0.0
        %v1717 = vand.u32 %v1314, 4294901760
        %v1718 = vsub.f32 %v1314, %v1717
        %1719 = vmatpush1.msra.mxu0 %v1718
        %1720 = vmatprep.subr.mxu0 0.0
        %v1721 = vand.u32 %v1315, 4294901760
        %v1722 = vsub.f32 %v1315, %v1721
        %1723 = vmatpush1.msra.mxu0 %v1722
        %1724 = vmatprep.subr.mxu0 0.0
        %v1725 = vand.u32 %v1316, 4294901760
        %v1726 = vsub.f32 %v1316, %v1725
        %1727 = vmatpush1.msra.mxu0 %v1726
        %1728 = vmatprep.subr.mxu0 0.0
        %v1729 = vand.u32 %v1317, 4294901760
        %v1730 = vsub.f32 %v1317, %v1729
        %1731 = vmatpush1.msra.mxu0 %v1730
        %1732 = vmatprep.subr.mxu0 0.0
        %v1733 = vand.u32 %v1318, 4294901760
        %v1734 = vsub.f32 %v1318, %v1733
        %1735 = vmatpush1.msra.mxu0 %v1734
        %1736 = vmatprep.subr.mxu0 0.0
        %v1737 = vand.u32 %v1319, 4294901760
        %v1738 = vsub.f32 %v1319, %v1737
        %1739 = vmatpush1.msra.mxu0 %v1738
        %1740 = vmatprep.subr.mxu0 0.0
        %v1741 = vand.u32 %v1320, 4294901760
        %v1742 = vsub.f32 %v1320, %v1741
        %1743 = vmatpush1.msra.mxu0 %v1742
        %1744 = vmatprep.subr.mxu0 0.0
        %v1745 = vand.u32 %v1321, 4294901760
        %v1746 = vsub.f32 %v1321, %v1745
        %1747 = vmatpush1.msra.mxu0 %v1746
        %1748 = vmatprep.subr.mxu0 0.0
        %v1749 = vand.u32 %v1322, 4294901760
        %v1750 = vsub.f32 %v1322, %v1749
        %1751 = vmatpush1.msra.mxu0 %v1750
        %1752 = vmatprep.subr.mxu0 0.0
        %v1753 = vand.u32 %v1323, 4294901760
        %v1754 = vsub.f32 %v1323, %v1753
        %1755 = vmatpush1.msra.mxu0 %v1754
        %1756 = vmatprep.subr.mxu0 0.0
        %v1757 = vand.u32 %v1324, 4294901760
        %v1758 = vsub.f32 %v1324, %v1757
        %1759 = vmatpush1.msra.mxu0 %v1758
        %1760 = vmatprep.subr.mxu0 0.0
        %v1761 = vand.u32 %v1325, 4294901760
        %v1762 = vsub.f32 %v1325, %v1761
        %1763 = vmatpush1.msra.mxu0 %v1762
        %1764 = vmatprep.subr.mxu0 0.0
        %v1765 = vand.u32 %v1326, 4294901760
        %v1766 = vsub.f32 %v1326, %v1765
        %1767 = vmatpush1.msra.mxu0 %v1766
        %1768 = vmatprep.subr.mxu0 0.0
        %v1769 = vand.u32 %v1327, 4294901760
        %v1770 = vsub.f32 %v1327, %v1769
        %1771 = vmatpush1.msra.mxu0 %v1770
        %1772 = vmatprep.subr.mxu0 0.0
        %v1773 = vand.u32 %v1328, 4294901760
        %v1774 = vsub.f32 %v1328, %v1773
        %1775 = vmatpush1.msra.mxu0 %v1774
        %1776 = vmatprep.subr.mxu0 0.0
        %v1777 = vand.u32 %v1329, 4294901760
        %v1778 = vsub.f32 %v1329, %v1777
        %1779 = vmatpush1.msra.mxu0 %v1778
        %1780 = vmatprep.subr.mxu0 0.0
        %1781 = vmatpush1.msra.mxu0 0.0
        %1782 = vmatprep.subr.mxu0 0.0
        %1783 = vmatpush1.msra.mxu0 0.0
        %1784 = vmatprep.subr.mxu0 0.0
        %1785 = vmatpush1.msra.mxu0 0.0
        %1786 = vmatprep.subr.mxu0 0.0
        %1787 = vmatpush1.msra.mxu0 0.0
        %1788 = vmatprep.subr.mxu0 0.0
        %1789 = vmatpush1.msra.mxu0 0.0
        %v1790 = vand.u32 %v1331, 4294901760
        %v1791 = vsub.f32 %v1331, %v1790
        %1792 = vmatprep.mubr.f32.mxu0 %v1791
        %v1793 = vand.u32 %v1299, 4294901760
        %v1794 = vsub.f32 %v1299, %v1793
        %1795 = vmatmul.mubr.f32.gmra.mrb[0].mxu0 %v1794
        %v1796 = vpop.f32.mrb[0].mxu0
        %v1797 = vadd.f32 %v1662, %v1796
        %v1798 = vpop.f32.mrb[0].mxu0
        %v1799 = vand.u32 %v1334, 4294901760
        %v1800 = vsub.f32 %v1334, %v1799
        %1801 = vmatprep.mubr.f32.mxu0 %v1800
        %v1802 = vand.u32 %v1300, 4294901760
        %v1803 = vsub.f32 %v1300, %v1802
        %1804 = vmatmul.mubr.f32.gmra.mrb[0].mxu0 %v1803
        %v1805 = vpop.f32.mrb[0].mxu0
        %v1806 = vadd.f32 %v1669, %v1805
        %v1807 = vpop.f32.mrb[0].mxu0
        %1808 = vdwg.mxu0
        %1809 = vmatprep.subr.mxu0 0.0
        %v1810 = vand.u32 %v1303, 4294901760
        %1811 = vmatpush1.msra.mxu0 %v1810
        %1812 = vmatprep.subr.mxu0 0.0
        %v1813 = vand.u32 %v1304, 4294901760
        %1814 = vmatpush1.msra.mxu0 %v1813
        %1815 = vmatprep.subr.mxu0 0.0
        %v1816 = vand.u32 %v1305, 4294901760
        %1817 = vmatpush1.msra.mxu0 %v1816
        %1818 = vmatprep.subr.mxu0 0.0
        %v1819 = vand.u32 %v1306, 4294901760
        %1820 = vmatpush1.msra.mxu0 %v1819
        %1821 = vmatprep.subr.mxu0 0.0
        %v1822 = vand.u32 %v1307, 4294901760
        %1823 = vmatpush1.msra.mxu0 %v1822
        %1824 = vmatprep.subr.mxu0 0.0
        %v1825 = vand.u32 %v1308, 4294901760
        %1826 = vmatpush1.msra.mxu0 %v1825
        %1827 = vmatprep.subr.mxu0 0.0
        %v1828 = vand.u32 %v1309, 4294901760
        %1829 = vmatpush1.msra.mxu0 %v1828
        %1830 = vmatprep.subr.mxu0 0.0
        %v1831 = vand.u32 %v1310, 4294901760
        %1832 = vmatpush1.msra.mxu0 %v1831
        %1833 = vmatprep.subr.mxu0 0.0
        %v1834 = vand.u32 %v1311, 4294901760
        %1835 = vmatpush1.msra.mxu0 %v1834
        %1836 = vmatprep.subr.mxu0 0.0
        %v1837 = vand.u32 %v1312, 4294901760
        %1838 = vmatpush1.msra.mxu0 %v1837
        %1839 = vmatprep.subr.mxu0 0.0
        %v1840 = vand.u32 %v1313, 4294901760
        %1841 = vmatpush1.msra.mxu0 %v1840
        %1842 = vmatprep.subr.mxu0 0.0
        %v1843 = vand.u32 %v1314, 4294901760
        %1844 = vmatpush1.msra.mxu0 %v1843
        %1845 = vmatprep.subr.mxu0 0.0
        %v1846 = vand.u32 %v1315, 4294901760
        %1847 = vmatpush1.msra.mxu0 %v1846
        %1848 = vmatprep.subr.mxu0 0.0
        %v1849 = vand.u32 %v1316, 4294901760
        %1850 = vmatpush1.msra.mxu0 %v1849
        %1851 = vmatprep.subr.mxu0 0.0
        %v1852 = vand.u32 %v1317, 4294901760
        %1853 = vmatpush1.msra.mxu0 %v1852
        %1854 = vmatprep.subr.mxu0 0.0
        %v1855 = vand.u32 %v1318, 4294901760
        %1856 = vmatpush1.msra.mxu0 %v1855
        %1857 = vmatprep.subr.mxu0 0.0
        %v1858 = vand.u32 %v1319, 4294901760
        %1859 = vmatpush1.msra.mxu0 %v1858
        %1860 = vmatprep.subr.mxu0 0.0
        %v1861 = vand.u32 %v1320, 4294901760
        %1862 = vmatpush1.msra.mxu0 %v1861
        %1863 = vmatprep.subr.mxu0 0.0
        %v1864 = vand.u32 %v1321, 4294901760
        %1865 = vmatpush1.msra.mxu0 %v1864
        %1866 = vmatprep.subr.mxu0 0.0
        %v1867 = vand.u32 %v1322, 4294901760
        %1868 = vmatpush1.msra.mxu0 %v1867
        %1869 = vmatprep.subr.mxu0 0.0
        %v1870 = vand.u32 %v1323, 4294901760
        %1871 = vmatpush1.msra.mxu0 %v1870
        %1872 = vmatprep.subr.mxu0 0.0
        %v1873 = vand.u32 %v1324, 4294901760
        %1874 = vmatpush1.msra.mxu0 %v1873
        %1875 = vmatprep.subr.mxu0 0.0
        %v1876 = vand.u32 %v1325, 4294901760
        %1877 = vmatpush1.msra.mxu0 %v1876
        %1878 = vmatprep.subr.mxu0 0.0
        %v1879 = vand.u32 %v1326, 4294901760
        %1880 = vmatpush1.msra.mxu0 %v1879
        %1881 = vmatprep.subr.mxu0 0.0
        %v1882 = vand.u32 %v1327, 4294901760
        %1883 = vmatpush1.msra.mxu0 %v1882
        %1884 = vmatprep.subr.mxu0 0.0
        %v1885 = vand.u32 %v1328, 4294901760
        %1886 = vmatpush1.msra.mxu0 %v1885
        %1887 = vmatprep.subr.mxu0 0.0
        %v1888 = vand.u32 %v1329, 4294901760
        %1889 = vmatpush1.msra.mxu0 %v1888
        %1890 = vmatprep.subr.mxu0 0.0
        %1891 = vmatpush1.msra.mxu0 0.0
        %1892 = vmatprep.subr.mxu0 0.0
        %1893 = vmatpush1.msra.mxu0 0.0
        %1894 = vmatprep.subr.mxu0 0.0
        %1895 = vmatpush1.msra.mxu0 0.0
        %1896 = vmatprep.subr.mxu0 0.0
        %1897 = vmatpush1.msra.mxu0 0.0
        %1898 = vmatprep.subr.mxu0 0.0
        %1899 = vmatpush1.msra.mxu0 0.0
        %v1900 = vand.u32 %v1331, 4294901760
        %v1901 = vsub.f32 %v1331, %v1900
        %v1902 = vand.u32 %v1901, 4294901760
        %1903 = vmatprep.mubr.f32.mxu0 %v1902
        %v1904 = vand.u32 %v1299, 4294901760
        %v1905 = vsub.f32 %v1299, %v1904
        %v1906 = vand.u32 %v1905, 4294901760
        %1907 = vmatmul.mubr.f32.gmra.mrb[0].mxu0 %v1906
        %v1908 = vpop.f32.mrb[0].mxu0
        %v1909 = vadd.f32 %v1797, %v1908
        %v1910 = vpop.f32.mrb[0].mxu0
        %v1911 = vand.u32 %v1334, 4294901760
        %v1912 = vsub.f32 %v1334, %v1911
        %v1913 = vand.u32 %v1912, 4294901760
        %1914 = vmatprep.mubr.f32.mxu0 %v1913
        %v1915 = vand.u32 %v1300, 4294901760
        %v1916 = vsub.f32 %v1300, %v1915
        %v1917 = vand.u32 %v1916, 4294901760
        %1918 = vmatmul.mubr.f32.gmra.mrb[0].mxu0 %v1917
        %v1919 = vpop.f32.mrb[0].mxu0
        %v1920 = vadd.f32 %v1806, %v1919
        %v1921 = vpop.f32.mrb[0].mxu0
        %1922 = vdwg.mxu0
        %1923 = vmatprep.subr.mxu0 0.0
        %v1924 = vand.u32 %v1303, 4294901760
        %v1925 = vsub.f32 %v1303, %v1924
        %v1926 = vand.u32 %v1925, 4294901760
        %1927 = vmatpush1.msra.mxu0 %v1926
        %1928 = vmatprep.subr.mxu0 0.0
        %v1929 = vand.u32 %v1304, 4294901760
        %v1930 = vsub.f32 %v1304, %v1929
        %v1931 = vand.u32 %v1930, 4294901760
        %1932 = vmatpush1.msra.mxu0 %v1931
        %1933 = vmatprep.subr.mxu0 0.0
        %v1934 = vand.u32 %v1305, 4294901760
        %v1935 = vsub.f32 %v1305, %v1934
        %v1936 = vand.u32 %v1935, 4294901760
        %1937 = vmatpush1.msra.mxu0 %v1936
        %1938 = vmatprep.subr.mxu0 0.0
        %v1939 = vand.u32 %v1306, 4294901760
        %v1940 = vsub.f32 %v1306, %v1939
        %v1941 = vand.u32 %v1940, 4294901760
        %1942 = vmatpush1.msra.mxu0 %v1941
        %1943 = vmatprep.subr.mxu0 0.0
        %v1944 = vand.u32 %v1307, 4294901760
        %v1945 = vsub.f32 %v1307, %v1944
        %v1946 = vand.u32 %v1945, 4294901760
        %1947 = vmatpush1.msra.mxu0 %v1946
        %1948 = vmatprep.subr.mxu0 0.0
        %v1949 = vand.u32 %v1308, 4294901760
        %v1950 = vsub.f32 %v1308, %v1949
        %v1951 = vand.u32 %v1950, 4294901760
        %1952 = vmatpush1.msra.mxu0 %v1951
        %1953 = vmatprep.subr.mxu0 0.0
        %v1954 = vand.u32 %v1309, 4294901760
        %v1955 = vsub.f32 %v1309, %v1954
        %v1956 = vand.u32 %v1955, 4294901760
        %1957 = vmatpush1.msra.mxu0 %v1956
        %1958 = vmatprep.subr.mxu0 0.0
        %v1959 = vand.u32 %v1310, 4294901760
        %v1960 = vsub.f32 %v1310, %v1959
        %v1961 = vand.u32 %v1960, 4294901760
        %1962 = vmatpush1.msra.mxu0 %v1961
        %1963 = vmatprep.subr.mxu0 0.0
        %v1964 = vand.u32 %v1311, 4294901760
        %v1965 = vsub.f32 %v1311, %v1964
        %v1966 = vand.u32 %v1965, 4294901760
        %1967 = vmatpush1.msra.mxu0 %v1966
        %1968 = vmatprep.subr.mxu0 0.0
        %v1969 = vand.u32 %v1312, 4294901760
        %v1970 = vsub.f32 %v1312, %v1969
        %v1971 = vand.u32 %v1970, 4294901760
        %1972 = vmatpush1.msra.mxu0 %v1971
        %1973 = vmatprep.subr.mxu0 0.0
        %v1974 = vand.u32 %v1313, 4294901760
        %v1975 = vsub.f32 %v1313, %v1974
        %v1976 = vand.u32 %v1975, 4294901760
        %1977 = vmatpush1.msra.mxu0 %v1976
        %1978 = vmatprep.subr.mxu0 0.0
        %v1979 = vand.u32 %v1314, 4294901760
        %v1980 = vsub.f32 %v1314, %v1979
        %v1981 = vand.u32 %v1980, 4294901760
        %1982 = vmatpush1.msra.mxu0 %v1981
        %1983 = vmatprep.subr.mxu0 0.0
        %v1984 = vand.u32 %v1315, 4294901760
        %v1985 = vsub.f32 %v1315, %v1984
        %v1986 = vand.u32 %v1985, 4294901760
        %1987 = vmatpush1.msra.mxu0 %v1986
        %1988 = vmatprep.subr.mxu0 0.0
        %v1989 = vand.u32 %v1316, 4294901760
        %v1990 = vsub.f32 %v1316, %v1989
        %v1991 = vand.u32 %v1990, 4294901760
        %1992 = vmatpush1.msra.mxu0 %v1991
        %1993 = vmatprep.subr.mxu0 0.0
        %v1994 = vand.u32 %v1317, 4294901760
        %v1995 = vsub.f32 %v1317, %v1994
        %v1996 = vand.u32 %v1995, 4294901760
        %1997 = vmatpush1.msra.mxu0 %v1996
        %1998 = vmatprep.subr.mxu0 0.0
        %v1999 = vand.u32 %v1318, 4294901760
        %v2000 = vsub.f32 %v1318, %v1999
        %v2001 = vand.u32 %v2000, 4294901760
        %2002 = vmatpush1.msra.mxu0 %v2001
        %2003 = vmatprep.subr.mxu0 0.0
        %v2004 = vand.u32 %v1319, 4294901760
        %v2005 = vsub.f32 %v1319, %v2004
        %v2006 = vand.u32 %v2005, 4294901760
        %2007 = vmatpush1.msra.mxu0 %v2006
        %2008 = vmatprep.subr.mxu0 0.0
        %v2009 = vand.u32 %v1320, 4294901760
        %v2010 = vsub.f32 %v1320, %v2009
        %v2011 = vand.u32 %v2010, 4294901760
        %2012 = vmatpush1.msra.mxu0 %v2011
        %2013 = vmatprep.subr.mxu0 0.0
        %v2014 = vand.u32 %v1321, 4294901760
        %v2015 = vsub.f32 %v1321, %v2014
        %v2016 = vand.u32 %v2015, 4294901760
        %2017 = vmatpush1.msra.mxu0 %v2016
        %2018 = vmatprep.subr.mxu0 0.0
        %v2019 = vand.u32 %v1322, 4294901760
        %v2020 = vsub.f32 %v1322, %v2019
        %v2021 = vand.u32 %v2020, 4294901760
        %2022 = vmatpush1.msra.mxu0 %v2021
        %2023 = vmatprep.subr.mxu0 0.0
        %v2024 = vand.u32 %v1323, 4294901760
        %v2025 = vsub.f32 %v1323, %v2024
        %v2026 = vand.u32 %v2025, 4294901760
        %2027 = vmatpush1.msra.mxu0 %v2026
        %2028 = vmatprep.subr.mxu0 0.0
        %v2029 = vand.u32 %v1324, 4294901760
        %v2030 = vsub.f32 %v1324, %v2029
        %v2031 = vand.u32 %v2030, 4294901760
        %2032 = vmatpush1.msra.mxu0 %v2031
        %2033 = vmatprep.subr.mxu0 0.0
        %v2034 = vand.u32 %v1325, 4294901760
        %v2035 = vsub.f32 %v1325, %v2034
        %v2036 = vand.u32 %v2035, 4294901760
        %2037 = vmatpush1.msra.mxu0 %v2036
        %2038 = vmatprep.subr.mxu0 0.0
        %v2039 = vand.u32 %v1326, 4294901760
        %v2040 = vsub.f32 %v1326, %v2039
        %v2041 = vand.u32 %v2040, 4294901760
        %2042 = vmatpush1.msra.mxu0 %v2041
        %2043 = vmatprep.subr.mxu0 0.0
        %v2044 = vand.u32 %v1327, 4294901760
        %v2045 = vsub.f32 %v1327, %v2044
        %v2046 = vand.u32 %v2045, 4294901760
        %2047 = vmatpush1.msra.mxu0 %v2046
        %2048 = vmatprep.subr.mxu0 0.0
        %v2049 = vand.u32 %v1328, 4294901760
        %v2050 = vsub.f32 %v1328, %v2049
        %v2051 = vand.u32 %v2050, 4294901760
        %2052 = vmatpush1.msra.mxu0 %v2051
        %2053 = vmatprep.subr.mxu0 0.0
        %v2054 = vand.u32 %v1329, 4294901760
        %v2055 = vsub.f32 %v1329, %v2054
        %v2056 = vand.u32 %v2055, 4294901760
        %2057 = vmatpush1.msra.mxu0 %v2056
        %2058 = vmatprep.subr.mxu0 0.0
        %2059 = vmatpush1.msra.mxu0 0.0
        %2060 = vmatprep.subr.mxu0 0.0
        %2061 = vmatpush1.msra.mxu0 0.0
        %2062 = vmatprep.subr.mxu0 0.0
        %2063 = vmatpush1.msra.mxu0 0.0
        %2064 = vmatprep.subr.mxu0 0.0
        %2065 = vmatpush1.msra.mxu0 0.0
        %2066 = vmatprep.subr.mxu0 0.0
        %2067 = vmatpush1.msra.mxu0 0.0
        %v2068 = vand.u32 %v1331, 4294901760
        %2069 = vmatprep.mubr.f32.mxu0 %v2068
        %v2070 = vand.u32 %v1299, 4294901760
        %2071 = vmatmul.mubr.f32.gmra.mrb[0].mxu0 %v2070
        %v2072 = vpop.f32.mrb[0].mxu0
        %v2073 = vadd.f32 %v1909, %v2072
        %v2074 = vpop.f32.mrb[0].mxu0
        %v2075 = vand.u32 %v1334, 4294901760
        %2076 = vmatprep.mubr.f32.mxu0 %v2075
        %v2077 = vand.u32 %v1300, 4294901760
        %2078 = vmatmul.mubr.f32.gmra.mrb[0].mxu0 %v2077
        %v2079 = vpop.f32.mrb[0].mxu0
        %v2080 = vadd.f32 %v1920, %v2079
        %v2081 = vpop.f32.mrb[0].mxu0
        %2082 = vdwg.mxu0
        %2083 = vmatprep.subr.mxu0 0.0
        %v2084 = vand.u32 %v1303, 4294901760
        %2085 = vmatpush1.msra.mxu0 %v2084
        %2086 = vmatprep.subr.mxu0 0.0
        %v2087 = vand.u32 %v1304, 4294901760
        %2088 = vmatpush1.msra.mxu0 %v2087
        %2089 = vmatprep.subr.mxu0 0.0
        %v2090 = vand.u32 %v1305, 4294901760
        %2091 = vmatpush1.msra.mxu0 %v2090
        %2092 = vmatprep.subr.mxu0 0.0
        %v2093 = vand.u32 %v1306, 4294901760
        %2094 = vmatpush1.msra.mxu0 %v2093
        %2095 = vmatprep.subr.mxu0 0.0
        %v2096 = vand.u32 %v1307, 4294901760
        %2097 = vmatpush1.msra.mxu0 %v2096
        %2098 = vmatprep.subr.mxu0 0.0
        %v2099 = vand.u32 %v1308, 4294901760
        %2100 = vmatpush1.msra.mxu0 %v2099
        %2101 = vmatprep.subr.mxu0 0.0
        %v2102 = vand.u32 %v1309, 4294901760
        %2103 = vmatpush1.msra.mxu0 %v2102
        %2104 = vmatprep.subr.mxu0 0.0
        %v2105 = vand.u32 %v1310, 4294901760
        %2106 = vmatpush1.msra.mxu0 %v2105
        %2107 = vmatprep.subr.mxu0 0.0
        %v2108 = vand.u32 %v1311, 4294901760
        %2109 = vmatpush1.msra.mxu0 %v2108
        %2110 = vmatprep.subr.mxu0 0.0
        %v2111 = vand.u32 %v1312, 4294901760
        %2112 = vmatpush1.msra.mxu0 %v2111
        %2113 = vmatprep.subr.mxu0 0.0
        %v2114 = vand.u32 %v1313, 4294901760
        %2115 = vmatpush1.msra.mxu0 %v2114
        %2116 = vmatprep.subr.mxu0 0.0
        %v2117 = vand.u32 %v1314, 4294901760
        %2118 = vmatpush1.msra.mxu0 %v2117
        %2119 = vmatprep.subr.mxu0 0.0
        %v2120 = vand.u32 %v1315, 4294901760
        %2121 = vmatpush1.msra.mxu0 %v2120
        %2122 = vmatprep.subr.mxu0 0.0
        %v2123 = vand.u32 %v1316, 4294901760
        %2124 = vmatpush1.msra.mxu0 %v2123
        %2125 = vmatprep.subr.mxu0 0.0
        %v2126 = vand.u32 %v1317, 4294901760
        %2127 = vmatpush1.msra.mxu0 %v2126
        %2128 = vmatprep.subr.mxu0 0.0
        %v2129 = vand.u32 %v1318, 4294901760
        %2130 = vmatpush1.msra.mxu0 %v2129
        %2131 = vmatprep.subr.mxu0 0.0
        %v2132 = vand.u32 %v1319, 4294901760
        %2133 = vmatpush1.msra.mxu0 %v2132
        %2134 = vmatprep.subr.mxu0 0.0
        %v2135 = vand.u32 %v1320, 4294901760
        %2136 = vmatpush1.msra.mxu0 %v2135
        %2137 = vmatprep.subr.mxu0 0.0
        %v2138 = vand.u32 %v1321, 4294901760
        %2139 = vmatpush1.msra.mxu0 %v2138
        %2140 = vmatprep.subr.mxu0 0.0
        %v2141 = vand.u32 %v1322, 4294901760
        %2142 = vmatpush1.msra.mxu0 %v2141
        %2143 = vmatprep.subr.mxu0 0.0
        %v2144 = vand.u32 %v1323, 4294901760
        %2145 = vmatpush1.msra.mxu0 %v2144
        %2146 = vmatprep.subr.mxu0 0.0
        %v2147 = vand.u32 %v1324, 4294901760
        %2148 = vmatpush1.msra.mxu0 %v2147
        %2149 = vmatprep.subr.mxu0 0.0
        %v2150 = vand.u32 %v1325, 4294901760
        %2151 = vmatpush1.msra.mxu0 %v2150
        %2152 = vmatprep.subr.mxu0 0.0
        %v2153 = vand.u32 %v1326, 4294901760
        %2154 = vmatpush1.msra.mxu0 %v2153
        %2155 = vmatprep.subr.mxu0 0.0
        %v2156 = vand.u32 %v1327, 4294901760
        %2157 = vmatpush1.msra.mxu0 %v2156
        %2158 = vmatprep.subr.mxu0 0.0
        %v2159 = vand.u32 %v1328, 4294901760
        %2160 = vmatpush1.msra.mxu0 %v2159
        %2161 = vmatprep.subr.mxu0 0.0
        %v2162 = vand.u32 %v1329, 4294901760
        %2163 = vmatpush1.msra.mxu0 %v2162
        %2164 = vmatprep.subr.mxu0 0.0
        %2165 = vmatpush1.msra.mxu0 0.0
        %2166 = vmatprep.subr.mxu0 0.0
        %2167 = vmatpush1.msra.mxu0 0.0
        %2168 = vmatprep.subr.mxu0 0.0
        %2169 = vmatpush1.msra.mxu0 0.0
        %2170 = vmatprep.subr.mxu0 0.0
        %2171 = vmatpush1.msra.mxu0 0.0
        %2172 = vmatprep.subr.mxu0 0.0
        %2173 = vmatpush1.msra.mxu0 0.0
        %v2174 = vand.u32 %v1331, 4294901760
        %2175 = vmatprep.mubr.f32.mxu0 %v2174
        %v2176 = vand.u32 %v1299, 4294901760
        %2177 = vmatmul.mubr.f32.gmra.mrb[0].mxu0 %v2176
        %v2178 = vpop.f32.mrb[0].mxu0
        %v2179 = vadd.f32 %v2073, %v2178
        %v2180 = vpop.f32.mrb[0].mxu0
        %v2181 = vand.u32 %v1334, 4294901760
        %2182 = vmatprep.mubr.f32.mxu0 %v2181
        %v2183 = vand.u32 %v1300, 4294901760
        %2184 = vmatmul.mubr.f32.gmra.mrb[0].mxu0 %v2183
        %v2185 = vpop.f32.mrb[0].mxu0
        %v2186 = vadd.f32 %v2080, %v2185
        %v2187 = vpop.f32.mrb[0].mxu0
        %2188 = vdwg.mxu0
        %v2189 = vld [vmem:[%s5] sm:$0x1]
        %v2191 = vlaneseq
        %v2192 = vshrl.u32 %v2191, 7
        %v2193 = vsub.s32 0, %v2192
        %v2194 = vrot.slane %v2189, %v2193
        %v2196 = vmul.f32 %v2179, %v2194
        %v2197 = vmul.f32 %v2186, %v2194
        %v2198 = vld [vmem:[%s6] sm:$0x1]
        %v2200 = vlaneseq
        %v2201 = vshrl.u32 %v2200, 7
        %v2202 = vsub.s32 0, %v2201
        %v2203 = vrot.slane %v2198, %v2202
        %v2205 = vadd.f32 %v2196, %v2203
        %v2206 = vadd.f32 %v2197, %v2203
        %v2207 = vadd.f32 %v2205, %v277
        %v2208 = vadd.f32 %v2206, %v278
        %vm2209 = vcmask 523264
        %2210 = vst.msk [vmem:[%s271] sm:$0xff] %vm2209, %v2207
        %2211 = vst.msk [vmem:[%s271 + $0x8] sm:$0xff] %vm2209, %v2208
        %s2212 = sand.u32 %s181, 1
        %s2213 = scalar_lea.sflag [#allocation3], %s2212
        %s2214 = sand.u32 %s181, 1
        %s2215 = smul.addr %s2214, 16
        %s2216 = scalar_lea.vmem [#allocation2], %s2215
        // Predicated region
        $region49: #{tpu_custom_call.1} parent=47 // pred_check
          %p2217 = pneg %p191
        $region50: #{tpu_custom_call.1} parent=47 // pred_check_branch
          %2219 = sbr.rel (%p2217) target = $region52
        $region51: #{tpu_custom_call.1} parent=47 // pred_region
          %s2221 = ssub.s32 256, 256
          %2222 = vsyncadd %s2213, %s2221
          %s2223 = smul.addr %s21, 2
          %s2224 = smul.addr %s2223, 128
          %s2225 = scalar_lea.hbm %s7, %s2224
          %s2226 = sshll.u32 %s2216, 4
          %s2227 = int_to_ptr.vmem [resolvable:$true] %s2226
          %2232 = dma.vmem_to_hbm [thread:$0]  %s2227, 256, %s2225, %s2213, 128, 128, 8
        $region52: #{tpu_custom_call.1} parent=47 // pred_fallthru
          _
      $region48: #{tpu_custom_call.1} parent=5 // pred_fallthru
        _
      %p2233 = scmp.le.s32.totalorder 2, %s16
      // Predicated region
      $region53: #{tpu_custom_call.1} parent=5 // pred_check
        %p2234 = pneg %p2233
      $region54: #{tpu_custom_call.1} parent=5 // pred_check_branch
        %2236 = sbr.rel (%p2234) target = $region56
      $region55: #{tpu_custom_call.1} parent=5 // pred_region
        %s2237 = ssub.s32 %s16, 2
        // Predicated region
        $region57: #{tpu_custom_call.1} parent=55 // pred_check
          %p2238 = pneg %p197
        $region58: #{tpu_custom_call.1} parent=55 // pred_check_branch
          %2240 = sbr.rel (%p2238) target = $region60
        $region59: #{tpu_custom_call.1} parent=55 // pred_region
          %s2241 = sand.u32 %s182, 1
          %s2242 = scalar_lea.sflag [#allocation3], %s2241
          %s2243 = sand.u32 %s182, 1
          %s2244 = smul.addr %s2243, 16
          %s2245 = scalar_lea.vmem [#allocation2], %s2244
          %2246 = dma.done %s2242, 256
        $region60: #{tpu_custom_call.1} parent=55 // pred_fallthru
          _
      $region56: #{tpu_custom_call.1} parent=5 // pred_fallthru
        _
    $region6: #{tpu_custom_call.1} parent=1 // loop_footer
      %s20 = sadd.s32 1, %s16
    $region7: #{tpu_custom_call.1} parent=1 // loop_footer_branch
      %15 = sbr.rel target = $region3
    $region8: #{tpu_custom_call.1} parent=1 // loop_exit
      _
    %2247 = vsyncpa [#allocation3], 1
    %s2248 = scalar_lea.sflag [#allocation3], 1
    %2249 = vsyncpa %s2248, 1

</llo_original>
